<compile_context>
chip_gen: v5e
topology: v5e:2x2
jax: 0.10.0
libtpu: 0.0.40
codegen_flags: <defaults>
</compile_context>

<pallas_src>
import math

import jax
import jax.numpy as jnp
from jax import lax
from jax.experimental import pallas as pl
from jax.experimental.pallas import tpu as pltpu

LANE = 128


def _round_up(x, m):
    return (x + m - 1) // m * m


# ---------------------------------------------------------------------------
# Reference layer math (plain JAX, PyTorch semantics).  Used (a) once at init
# to fold each layer into a dense GEMM operator and (b) as the numerical
# reference in __main__.  Never runs in the forward hot path.
# ---------------------------------------------------------------------------
def _conv_ref(x_chw, w, b, *, stride, padding):
    # x_chw: (Cin, H, W); w: PyTorch Conv2d layout (Cout, Cin, K, K)
    y = lax.conv_general_dilated(
        x_chw[None], w,
        window_strides=(stride, stride),
        padding=[(padding, padding), (padding, padding)],
        dimension_numbers=("NCHW", "OIHW", "NCHW"))
    return y[0] + b[:, None, None]


def _conv_transpose_ref(x_chw, w, b, *, stride, padding, output_padding):
    # x_chw: (Cin, H, W); w: PyTorch ConvTranspose2d layout (Cin, Cout, K, K).
    # Equivalent regular conv: flip spatial taps, swap in/out channels, zero
    # dilate the input by `stride`, pad by K-1-p (+ output_padding on hi side).
    k = w.shape[-1]
    w_eff = jnp.transpose(w[:, :, ::-1, ::-1], (1, 0, 2, 3))  # (Cout, Cin, K, K)
    lo = k - 1 - padding
    hi = k - 1 - padding + output_padding
    y = lax.conv_general_dilated(
        x_chw[None], w_eff,
        window_strides=(1, 1),
        padding=[(lo, hi), (lo, hi)],
        lhs_dilation=(stride, stride),
        dimension_numbers=("NCHW", "OIHW", "NCHW"))
    return y[0] + b[:, None, None]


# (kind, param name, layer kwargs, input (C, H, W), activation)
_LAYERS = (
    ("conv",  "e1", dict(stride=2, padding=1),                   (3, 16, 16), "relu"),
    ("conv",  "e2", dict(stride=2, padding=1),                   (8, 8, 8),   "relu"),
    ("conv",  "e3", dict(stride=1, padding=0),                   (8, 4, 4),   "none"),
    ("convt", "d1", dict(stride=1, padding=0, output_padding=0), (3, 2, 2),   "relu"),
    ("convt", "d2", dict(stride=2, padding=1, output_padding=1), (8, 4, 4),   "relu"),
    ("convt", "d3", dict(stride=2, padding=1, output_padding=1), (8, 8, 8),   "sigmoid"),
)


# ---------------------------------------------------------------------------
# One-time weight folding: conv layer -> lane-dense GEMM operator.
# ---------------------------------------------------------------------------
def build_cae1_operators(params):
    """Fold every conv / conv-transpose layer into a lane-dense GEMM operator.

    Each layer is affine in its input: f(v) = J @ v + f(0).  We extract J
    exactly with jax.jacfwd and store W = J.T zero-padded so its output dim is
    a multiple of 128 (lane-dense) and its input dim matches the previous
    layer's padded output.  Runs once at init; the forward pass never touches
    im2col / padding / dilation / weight transposes again.
    """
    mats, biases = [], []
    in_pad = None
    for kind, name, kwargs, in_shape, _act in _LAYERS:
        w, b = params[name + "_w"], params[name + "_b"]
        in_dim = math.prod(in_shape)

        def layer_flat(v, kind=kind, w=w, b=b, kwargs=kwargs, in_shape=in_shape):
            x = v.reshape(in_shape)
            if kind == "conv":
                y = _conv_ref(x, w, b, **kwargs)
            else:
                y = _conv_transpose_ref(x, w, b, **kwargs)
            return y.reshape(-1)

        zero = jnp.zeros((in_dim,), jnp.float32)
        jac = jax.jacfwd(layer_flat)(zero)           # (out_dim, in_dim) exact
        bias = layer_flat(zero)                      # (out_dim,)
        out_dim = int(bias.shape[0])

        if in_pad is None:                           # network input (3*16*16 = 768)
            in_pad = in_dim
            assert in_pad % LANE == 0, "flattened input must be lane aligned"
        assert in_pad >= in_dim
        out_pad = _round_up(out_dim, LANE)

        w_mat = jnp.zeros((in_pad, out_pad), jnp.float32).at[:in_dim, :out_dim].set(jac.T)
        b_row = jnp.zeros((1, out_pad), jnp.float32).at[:, :out_dim].set(bias)
        mats.append(w_mat)
        biases.append(b_row)
        in_pad = out_pad                             # padded channels carry zeros
    return tuple(mats), tuple(biases)


# ---------------------------------------------------------------------------
# The fused Pallas kernel: six chained GEMM + bias + activation stages.
# ---------------------------------------------------------------------------
def _cae1_fused_kernel(x_ref,
                       w1, b1, w2, b2, w3, b3, w4, b4, w5, b5, w6, b6,
                       o_ref):
    def gemm(h, w_ref, b_ref):
        # (tb, Din) @ (Din, Dout) on the MXU, f32 accumulate, + bias row.
        return jnp.dot(h, w_ref[...], preferred_element_type=jnp.float32) + b_ref[...]

    h = x_ref[...]                               # (tb, 768) flattened CHW input
    h = jnp.maximum(gemm(h, w1, b1), 0.0)        # Conv2d(3, 8, 3, s2, p1) + ReLU
    h = jnp.maximum(gemm(h, w2, b2), 0.0)        # Conv2d(8, 8, 3, s2, p1) + ReLU
    h = gemm(h, w3, b3)                          # Conv2d(8, 3, 3)          (latent)
    h = jnp.maximum(gemm(h, w4, b4), 0.0)        # ConvT(3, 8, 3) + ReLU
    h = jnp.maximum(gemm(h, w5, b5), 0.0)        # ConvT(8, 8, 3, s2, p1, op1) + ReLU
    z = gemm(h, w6, b6)                          # ConvT(8, 3, 3, s2, p1, op1)
    # sigmoid epilogue on the EUP (exp + approx reciprocal); VALU stays free.
    o_ref[...] = pl.reciprocal(1.0 + jnp.exp(-z), approx=True)


def _pick_block_rows(n):
    # Largest (8,128)-friendly batch tile that divides n; tiny batches run as a
    # single full block (block dim == full array dim is always legal).
    for tb in (256, 128, 64, 32, 16, 8):
        if n % tb == 0:
            return tb
    return n


def cae1_forward(x_nchw, operators):
    """CAE1 forward: NCHW in, NCHW out, entire network in one pallas_call."""
    mats, biases = operators
    n = x_nchw.shape[0]
    d_in = mats[0].shape[0]            # 3*16*16 = 768
    d_out = mats[-1].shape[1]          # 3*16*16 = 768 (already a multiple of 128)
    x_flat = x_nchw.reshape(n, d_in)   # CHW flattening == operator coordinates

    tb = _pick_block_rows(n)
    grid = (n // tb,)

    in_specs = [pl.BlockSpec((tb, d_in), lambda i: (i, 0))]
    args = [x_flat]
    for w_mat, b_row in zip(mats, biases):
        in_specs.append(pl.BlockSpec(w_mat.shape, lambda i: (0, 0)))  # whole block
        in_specs.append(pl.BlockSpec(b_row.shape, lambda i: (0, 0)))
        args += [w_mat, b_row]

    out = pl.pallas_call(
        _cae1_fused_kernel,
        out_shape=jax.ShapeDtypeStruct((n, d_out), jnp.float32),
        grid=grid,
        in_specs=in_specs,
        out_specs=pl.BlockSpec((tb, d_out), lambda i: (i, 0)),
        compiler_params=pltpu.CompilerParams(
            dimension_semantics=("parallel",),       # batch tiles split across TCs
            vmem_limit_bytes=32 * 1024 * 1024),
    )(*args)
    return out.reshape(n, 3, 16, 16)


# ---------------------------------------------------------------------------
# Deterministic PyTorch-style parameter init.
# ---------------------------------------------------------------------------
def _init_conv(key, cout, cin, k):
    kw, kb = jax.random.split(key)
    bound = 1.0 / math.sqrt(cin * k * k)
    w = jax.random.uniform(kw, (cout, cin, k, k), jnp.float32, -bound, bound)
    b = jax.random.uniform(kb, (cout,), jnp.float32, -bound, bound)
    return w, b


def _init_conv_transpose(key, cin, cout, k):
    kw, kb = jax.random.split(key)
    # PyTorch ConvTranspose2d fan-in = weight.size(1) * k * k = cout * k * k.
    bound = 1.0 / math.sqrt(cout * k * k)
    w = jax.random.uniform(kw, (cin, cout, k, k), jnp.float32, -bound, bound)
    b = jax.random.uniform(kb, (cout,), jnp.float32, -bound, bound)
    return w, b


def init_cae1_params(seed=0):
    keys = jax.random.split(jax.random.PRNGKey(seed), 6)
    p = {}
    p["e1_w"], p["e1_b"] = _init_conv(keys[0], 8, 3, 3)
    p["e2_w"], p["e2_b"] = _init_conv(keys[1], 8, 8, 3)
    p["e3_w"], p["e3_b"] = _init_conv(keys[2], 3, 8, 3)
    p["d1_w"], p["d1_b"] = _init_conv_transpose(keys[3], 3, 8, 3)
    p["d2_w"], p["d2_b"] = _init_conv_transpose(keys[4], 8, 8, 3)
    p["d3_w"], p["d3_b"] = _init_conv_transpose(keys[5], 8, 3, 3)
    return p


# ---------------------------------------------------------------------------
# Plain-JAX reference forward (for correctness checking only).
# ---------------------------------------------------------------------------
def cae1_reference(x_nchw, params):
    def single(x):
        h = x
        for kind, name, kwargs, _in_shape, act in _LAYERS:
            w, b = params[name + "_w"], params[name + "_b"]
            if kind == "conv":
                h = _conv_ref(h, w, b, **kwargs)
            else:
                h = _conv_transpose_ref(h, w, b, **kwargs)
            if act == "relu":
                h = jnp.maximum(h, 0.0)
            elif act == "sigmoid":
                h = jax.nn.sigmoid(h)
        return h
    return jax.vmap(single)(x_nchw)


if __name__ == "__main__":
    x = jax.random.normal(jax.random.PRNGKey(0), (2, 3, 16, 16), jnp.float32)  # NCHW
    params = init_cae1_params(seed=0)
    operators = build_cae1_operators(params)   # one-time weight folding (init)

    fwd = jax.jit(cae1_forward)
    y = jax.block_until_ready(fwd(x, operators))

    assert y.shape == (2, 3, 16, 16), y.shape
    assert bool(jnp.all(jnp.isfinite(y)))
    # sigmoid range (small slack for the EUP approximate reciprocal)
    assert bool(jnp.all((y >= -1e-3) & (y <= 1.0 + 1e-3)))

    y_ref = cae1_reference(x, params)
    err = float(jnp.max(jnp.abs(y - y_ref)))
    assert err < 1e-2, err

    print("KERNEL_OK")
</pallas_src>

<mosaic_0001>
module attributes {stable_mosaic.version = 11 : i64} {
  func.func @_cae1_fused_kernel(%arg0: i32, %arg1: memref<2x768xf32, #tpu.memory_space<vmem>>, %arg2: memref<768x512xf32, #tpu.memory_space<vmem>>, %arg3: memref<1x512xf32, #tpu.memory_space<vmem>>, %arg4: memref<512x128xf32, #tpu.memory_space<vmem>>, %arg5: memref<1x128xf32, #tpu.memory_space<vmem>>, %arg6: memref<128x128xf32, #tpu.memory_space<vmem>>, %arg7: memref<1x128xf32, #tpu.memory_space<vmem>>, %arg8: memref<128x128xf32, #tpu.memory_space<vmem>>, %arg9: memref<1x128xf32, #tpu.memory_space<vmem>>, %arg10: memref<128x512xf32, #tpu.memory_space<vmem>>, %arg11: memref<1x512xf32, #tpu.memory_space<vmem>>, %arg12: memref<512x768xf32, #tpu.memory_space<vmem>>, %arg13: memref<1x768xf32, #tpu.memory_space<vmem>>, %arg14: memref<2x768xf32, #tpu.memory_space<vmem>>) attributes {dimension_semantics = [#tpu.dimension_semantics<parallel>], iteration_bounds = array<i64: 1>, scalar_prefetch = 0 : i64, scratch_operands = 0 : i64, tpu.core_type = #tpu.core_type<tc>, window_params = [{transform_indices = @transform_0, window_bounds = array<i64: 2, 768>}, {pipeline_mode = #tpu.pipeline_mode<synchronous>, transform_indices = @transform_1, window_bounds = array<i64: 768, 512>}, {pipeline_mode = #tpu.pipeline_mode<synchronous>, transform_indices = @transform_2, window_bounds = array<i64: 1, 512>}, {pipeline_mode = #tpu.pipeline_mode<synchronous>, transform_indices = @transform_3, window_bounds = array<i64: 512, 128>}, {pipeline_mode = #tpu.pipeline_mode<synchronous>, transform_indices = @transform_4, window_bounds = array<i64: 1, 128>}, {pipeline_mode = #tpu.pipeline_mode<synchronous>, transform_indices = @transform_5, window_bounds = array<i64: 128, 128>}, {pipeline_mode = #tpu.pipeline_mode<synchronous>, transform_indices = @transform_6, window_bounds = array<i64: 1, 128>}, {pipeline_mode = #tpu.pipeline_mode<synchronous>, transform_indices = @transform_7, window_bounds = array<i64: 128, 128>}, {pipeline_mode = #tpu.pipeline_mode<synchronous>, transform_indices = @transform_8, window_bounds = array<i64: 1, 128>}, {pipeline_mode = #tpu.pipeline_mode<synchronous>, transform_indices = @transform_9, window_bounds = array<i64: 128, 512>}, {pipeline_mode = #tpu.pipeline_mode<synchronous>, transform_indices = @transform_10, window_bounds = array<i64: 1, 512>}, {pipeline_mode = #tpu.pipeline_mode<synchronous>, transform_indices = @transform_11, window_bounds = array<i64: 512, 768>}, {pipeline_mode = #tpu.pipeline_mode<synchronous>, transform_indices = @transform_12, window_bounds = array<i64: 1, 768>}, {transform_indices = @transform_13, window_bounds = array<i64: 2, 768>}]} {
    %c0 = arith.constant 0 : index
    %c0_0 = arith.constant 0 : index
    %0 = vector.load %arg1[%c0, %c0_0] : memref<2x768xf32, #tpu.memory_space<vmem>>, vector<2x768xf32>
    %c0_1 = arith.constant 0 : index
    %c0_2 = arith.constant 0 : index
    %1 = vector.load %arg2[%c0_1, %c0_2] : memref<768x512xf32, #tpu.memory_space<vmem>>, vector<768x512xf32>
    %cst = arith.constant dense<0.000000e+00> : vector<2x512xf32>
    %2 = tpu.matmul %0, %1, %cst {dimension_numbers = #tpu.dot_dimension_numbers<[1], [0], [0], [1], [0, 0, 1, 1], [], []>} : vector<2x768xf32>, vector<768x512xf32>, vector<2x512xf32> -> vector<2x512xf32>
    %c0_3 = arith.constant 0 : index
    %c0_4 = arith.constant 0 : index
    %3 = vector.load %arg3[%c0_3, %c0_4] : memref<1x512xf32, #tpu.memory_space<vmem>>, vector<1x512xf32>
    %4 = vector.broadcast %3 : vector<1x512xf32> to vector<2x512xf32>
    %5 = arith.addf %2, %4 : vector<2x512xf32>
    %cst_5 = arith.constant 0.000000e+00 : f32
    %6 = vector.broadcast %cst_5 : f32 to vector<2x512xf32>
    %7 = arith.maximumf %5, %6 : vector<2x512xf32>
    %c0_6 = arith.constant 0 : index
    %c0_7 = arith.constant 0 : index
    %8 = vector.load %arg4[%c0_6, %c0_7] : memref<512x128xf32, #tpu.memory_space<vmem>>, vector<512x128xf32>
    %cst_8 = arith.constant dense<0.000000e+00> : vector<2x128xf32>
    %9 = tpu.matmul %7, %8, %cst_8 {dimension_numbers = #tpu.dot_dimension_numbers<[1], [0], [0], [1], [0, 0, 1, 1], [], []>} : vector<2x512xf32>, vector<512x128xf32>, vector<2x128xf32> -> vector<2x128xf32>
    %c0_9 = arith.constant 0 : index
    %c0_10 = arith.constant 0 : index
    %10 = vector.load %arg5[%c0_9, %c0_10] : memref<1x128xf32, #tpu.memory_space<vmem>>, vector<1x128xf32>
    %11 = vector.broadcast %10 : vector<1x128xf32> to vector<2x128xf32>
    %12 = arith.addf %9, %11 : vector<2x128xf32>
    %cst_11 = arith.constant 0.000000e+00 : f32
    %13 = vector.broadcast %cst_11 : f32 to vector<2x128xf32>
    %14 = arith.maximumf %12, %13 : vector<2x128xf32>
    %c0_12 = arith.constant 0 : index
    %c0_13 = arith.constant 0 : index
    %15 = vector.load %arg6[%c0_12, %c0_13] : memref<128x128xf32, #tpu.memory_space<vmem>>, vector<128x128xf32>
    %cst_14 = arith.constant dense<0.000000e+00> : vector<2x128xf32>
    %16 = tpu.matmul %14, %15, %cst_14 {dimension_numbers = #tpu.dot_dimension_numbers<[1], [0], [0], [1], [0, 0, 1, 1], [], []>} : vector<2x128xf32>, vector<128x128xf32>, vector<2x128xf32> -> vector<2x128xf32>
    %c0_15 = arith.constant 0 : index
    %c0_16 = arith.constant 0 : index
    %17 = vector.load %arg7[%c0_15, %c0_16] : memref<1x128xf32, #tpu.memory_space<vmem>>, vector<1x128xf32>
    %18 = vector.broadcast %17 : vector<1x128xf32> to vector<2x128xf32>
    %19 = arith.addf %16, %18 : vector<2x128xf32>
    %c0_17 = arith.constant 0 : index
    %c0_18 = arith.constant 0 : index
    %20 = vector.load %arg8[%c0_17, %c0_18] : memref<128x128xf32, #tpu.memory_space<vmem>>, vector<128x128xf32>
    %cst_19 = arith.constant dense<0.000000e+00> : vector<2x128xf32>
    %21 = tpu.matmul %19, %20, %cst_19 {dimension_numbers = #tpu.dot_dimension_numbers<[1], [0], [0], [1], [0, 0, 1, 1], [], []>} : vector<2x128xf32>, vector<128x128xf32>, vector<2x128xf32> -> vector<2x128xf32>
    %c0_20 = arith.constant 0 : index
    %c0_21 = arith.constant 0 : index
    %22 = vector.load %arg9[%c0_20, %c0_21] : memref<1x128xf32, #tpu.memory_space<vmem>>, vector<1x128xf32>
    %23 = vector.broadcast %22 : vector<1x128xf32> to vector<2x128xf32>
    %24 = arith.addf %21, %23 : vector<2x128xf32>
    %cst_22 = arith.constant 0.000000e+00 : f32
    %25 = vector.broadcast %cst_22 : f32 to vector<2x128xf32>
    %26 = arith.maximumf %24, %25 : vector<2x128xf32>
    %c0_23 = arith.constant 0 : index
    %c0_24 = arith.constant 0 : index
    %27 = vector.load %arg10[%c0_23, %c0_24] : memref<128x512xf32, #tpu.memory_space<vmem>>, vector<128x512xf32>
    %cst_25 = arith.constant dense<0.000000e+00> : vector<2x512xf32>
    %28 = tpu.matmul %26, %27, %cst_25 {dimension_numbers = #tpu.dot_dimension_numbers<[1], [0], [0], [1], [0, 0, 1, 1], [], []>} : vector<2x128xf32>, vector<128x512xf32>, vector<2x512xf32> -> vector<2x512xf32>
    %c0_26 = arith.constant 0 : index
    %c0_27 = arith.constant 0 : index
    %29 = vector.load %arg11[%c0_26, %c0_27] : memref<1x512xf32, #tpu.memory_space<vmem>>, vector<1x512xf32>
    %30 = vector.broadcast %29 : vector<1x512xf32> to vector<2x512xf32>
    %31 = arith.addf %28, %30 : vector<2x512xf32>
    %cst_28 = arith.constant 0.000000e+00 : f32
    %32 = vector.broadcast %cst_28 : f32 to vector<2x512xf32>
    %33 = arith.maximumf %31, %32 : vector<2x512xf32>
    %c0_29 = arith.constant 0 : index
    %c0_30 = arith.constant 0 : index
    %34 = vector.load %arg12[%c0_29, %c0_30] : memref<512x768xf32, #tpu.memory_space<vmem>>, vector<512x768xf32>
    %cst_31 = arith.constant dense<0.000000e+00> : vector<2x768xf32>
    %35 = tpu.matmul %33, %34, %cst_31 {dimension_numbers = #tpu.dot_dimension_numbers<[1], [0], [0], [1], [0, 0, 1, 1], [], []>} : vector<2x512xf32>, vector<512x768xf32>, vector<2x768xf32> -> vector<2x768xf32>
    %c0_32 = arith.constant 0 : index
    %c0_33 = arith.constant 0 : index
    %36 = vector.load %arg13[%c0_32, %c0_33] : memref<1x768xf32, #tpu.memory_space<vmem>>, vector<1x768xf32>
    %37 = vector.broadcast %36 : vector<1x768xf32> to vector<2x768xf32>
    %38 = arith.addf %35, %37 : vector<2x768xf32>
    %cst_34 = arith.constant 0.000000e+00 : f32
    %39 = vector.broadcast %cst_34 : f32 to vector<2x768xf32>
    %40 = arith.subf %39, %38 : vector<2x768xf32>
    %41 = math.exp %40 : vector<2x768xf32>
    %cst_35 = arith.constant 1.000000e+00 : f32
    %42 = vector.broadcast %cst_35 : f32 to vector<2x768xf32>
    %43 = arith.addf %42, %41 : vector<2x768xf32>
    %44 = tpu.reciprocal %43 {approx = true} : vector<2x768xf32> -> vector<2x768xf32>
    %c0_36 = arith.constant 0 : index
    %c0_37 = arith.constant 0 : index
    %45 = vector.load %arg14[%c0_36, %c0_37] : memref<2x768xf32, #tpu.memory_space<vmem>>, vector<2x768xf32>
    tpu.vector_store %arg14[%c0_36, %c0_37], %44 {strides = array<i32>} : memref<2x768xf32, #tpu.memory_space<vmem>>, vector<2x768xf32>,
    return
  }
  func.func @transform_0(%arg0: i32) -> (i32, i32) {
    %c0_i32 = arith.constant 0 : i32
    %c0_i32_0 = arith.constant 0 : i32
    return %arg0, %c0_i32 : i32, i32
  }
  func.func @transform_1(%arg0: i32) -> (i32, i32) {
    %c0_i32 = arith.constant 0 : i32
    %c0_i32_0 = arith.constant 0 : i32
    %c0_i32_1 = arith.constant 0 : i32
    return %c0_i32, %c0_i32_0 : i32, i32
  }
  func.func @transform_2(%arg0: i32) -> (i32, i32) {
    %c0_i32 = arith.constant 0 : i32
    %c0_i32_0 = arith.constant 0 : i32
    %c0_i32_1 = arith.constant 0 : i32
    return %c0_i32, %c0_i32_0 : i32, i32
  }
  func.func @transform_3(%arg0: i32) -> (i32, i32) {
    %c0_i32 = arith.constant 0 : i32
    %c0_i32_0 = arith.constant 0 : i32
    %c0_i32_1 = arith.constant 0 : i32
    return %c0_i32, %c0_i32_0 : i32, i32
  }
  func.func @transform_4(%arg0: i32) -> (i32, i32) {
    %c0_i32 = arith.constant 0 : i32
    %c0_i32_0 = arith.constant 0 : i32
    %c0_i32_1 = arith.constant 0 : i32
    return %c0_i32, %c0_i32_0 : i32, i32
  }
  func.func @transform_5(%arg0: i32) -> (i32, i32) {
    %c0_i32 = arith.constant 0 : i32
    %c0_i32_0 = arith.constant 0 : i32
    %c0_i32_1 = arith.constant 0 : i32
    return %c0_i32, %c0_i32_0 : i32, i32
  }
  func.func @transform_6(%arg0: i32) -> (i32, i32) {
    %c0_i32 = arith.constant 0 : i32
    %c0_i32_0 = arith.constant 0 : i32
    %c0_i32_1 = arith.constant 0 : i32
    return %c0_i32, %c0_i32_0 : i32, i32
  }
  func.func @transform_7(%arg0: i32) -> (i32, i32) {
    %c0_i32 = arith.constant 0 : i32
    %c0_i32_0 = arith.constant 0 : i32
    %c0_i32_1 = arith.constant 0 : i32
    return %c0_i32, %c0_i32_0 : i32, i32
  }
  func.func @transform_8(%arg0: i32) -> (i32, i32) {
    %c0_i32 = arith.constant 0 : i32
    %c0_i32_0 = arith.constant 0 : i32
    %c0_i32_1 = arith.constant 0 : i32
    return %c0_i32, %c0_i32_0 : i32, i32
  }
  func.func @transform_9(%arg0: i32) -> (i32, i32) {
    %c0_i32 = arith.constant 0 : i32
    %c0_i32_0 = arith.constant 0 : i32
    %c0_i32_1 = arith.constant 0 : i32
    return %c0_i32, %c0_i32_0 : i32, i32
  }
  func.func @transform_10(%arg0: i32) -> (i32, i32) {
    %c0_i32 = arith.constant 0 : i32
    %c0_i32_0 = arith.constant 0 : i32
    %c0_i32_1 = arith.constant 0 : i32
    return %c0_i32, %c0_i32_0 : i32, i32
  }
  func.func @transform_11(%arg0: i32) -> (i32, i32) {
    %c0_i32 = arith.constant 0 : i32
    %c0_i32_0 = arith.constant 0 : i32
    %c0_i32_1 = arith.constant 0 : i32
    return %c0_i32, %c0_i32_0 : i32, i32
  }
  func.func @transform_12(%arg0: i32) -> (i32, i32) {
    %c0_i32 = arith.constant 0 : i32
    %c0_i32_0 = arith.constant 0 : i32
    %c0_i32_1 = arith.constant 0 : i32
    return %c0_i32, %c0_i32_0 : i32, i32
  }
  func.func @transform_13(%arg0: i32) -> (i32, i32) {
    %c0_i32 = arith.constant 0 : i32
    %c0_i32_0 = arith.constant 0 : i32
    return %arg0, %c0_i32 : i32, i32
  }
}

</mosaic_0001>

<llo_original>
// kernel: cae1_forward.1
$region0: #{cae1_forward.1}
  #allocation0 [shape = 'u32[]', space=smem, size = 0x4, offset = 0x4, fixed_abs, tag = 'smem constant byte address 0x4 - core index']
  #allocation1 [shape = 'u32[72,128]{1,0:T(1,128)}', space=vmem, size = 0x9000, scoped, tag = 'internal scratch']
  %s0 = inlined_call_operand.vmem [shape: f32[2,768], index: 0, kind: input, shape index: {}]
  %s1 = inlined_call_operand.hbm [shape: f32[768,512], index: 1, kind: input, shape index: {}]
  %s2 = inlined_call_operand.hbm [shape: f32[1,512], index: 2, kind: input, shape index: {}]
  %s3 = inlined_call_operand.hbm [shape: f32[512,128], index: 3, kind: input, shape index: {}]
  %s4 = inlined_call_operand.hbm [shape: f32[1,128], index: 4, kind: input, shape index: {}]
  %s5 = inlined_call_operand.hbm [shape: f32[128,128], index: 5, kind: input, shape index: {}]
  %s6 = inlined_call_operand.hbm [shape: f32[1,128], index: 6, kind: input, shape index: {}]
  %s7 = inlined_call_operand.hbm [shape: f32[128,128], index: 7, kind: input, shape index: {}]
  %s8 = inlined_call_operand.hbm [shape: f32[1,128], index: 8, kind: input, shape index: {}]
  %s9 = inlined_call_operand.hbm [shape: f32[128,512], index: 9, kind: input, shape index: {}]
  %s10 = inlined_call_operand.hbm [shape: f32[1,512], index: 10, kind: input, shape index: {}]
  %s11 = inlined_call_operand.hbm [shape: f32[512,768], index: 11, kind: input, shape index: {}]
  %s12 = inlined_call_operand.hbm [shape: f32[1,768], index: 12, kind: input, shape index: {}]
  %s13 = inlined_call_operand.vmem [shape: f32[2,768], index: 13, kind: output, shape index: {}]
  %s14 = sld [smem:[#allocation0]]
  $region110: #{cae1_forward.1} parent=0
    _
  %s16 = ssub.s32 1, %s14
  %s17 = scalar_select 0, %s16, %s14
  $region1: #{cae1_forward.1} parent=0
    #allocation2 [shape = 'u8[1572864]{0}', space=vmem, size = 0x180000, scoped, tag = 'input window, operand 1, single buffered']
    #allocation3 [shape = 's32[1]{0}', space=sflag, size = 0x4, scoped, tag = 'scoped memory for cae1_forward.1']
    #allocation4 [shape = 'u8[2048]{0}', space=vmem, size = 0x800, scoped, tag = 'input window, operand 2, single buffered']
    #allocation5 [shape = 's32[1]{0}', space=sflag, size = 0x4, scoped, tag = 'scoped memory for cae1_forward.1']
    #allocation6 [shape = 'u8[262144]{0}', space=vmem, size = 0x40000, scoped, tag = 'input window, operand 3, single buffered']
    #allocation7 [shape = 'u8[512]{0}', space=vmem, size = 0x400, scoped, tag = 'input window, operand 4, single buffered']
    #allocation8 [shape = 's32[1]{0}', space=sflag, size = 0x4, scoped, tag = 'scoped memory for cae1_forward.1']
    #allocation9 [shape = 'u8[65536]{0}', space=vmem, size = 0x10000, scoped, tag = 'input window, operand 5, single buffered']
    #allocation10 [shape = 'u8[512]{0}', space=vmem, size = 0x400, scoped, tag = 'input window, operand 6, single buffered']
    #allocation11 [shape = 's32[1]{0}', space=sflag, size = 0x4, scoped, tag = 'scoped memory for cae1_forward.1']
    #allocation12 [shape = 'u8[65536]{0}', space=vmem, size = 0x10000, scoped, tag = 'input window, operand 7, single buffered']
    #allocation13 [shape = 'u8[512]{0}', space=vmem, size = 0x400, scoped, tag = 'input window, operand 8, single buffered']
    #allocation14 [shape = 's32[1]{0}', space=sflag, size = 0x4, scoped, tag = 'scoped memory for cae1_forward.1']
    #allocation15 [shape = 'u8[262144]{0}', space=vmem, size = 0x40000, scoped, tag = 'input window, operand 9, single buffered']
    #allocation16 [shape = 'u8[2048]{0}', space=vmem, size = 0x800, scoped, tag = 'input window, operand 10, single buffered']
    #allocation17 [shape = 's32[1]{0}', space=sflag, size = 0x4, scoped, tag = 'scoped memory for cae1_forward.1']
    #allocation18 [shape = 'u8[1572864]{0}', space=vmem, size = 0x180000, scoped, tag = 'input window, operand 11, single buffered']
    #allocation19 [shape = 'u8[3072]{0}', space=vmem, size = 0xc00, scoped, tag = 'input window, operand 12, single buffered']
    #allocation20 [shape = 's32[1]{0}', space=sflag, size = 0x4, scoped, tag = 'scoped memory for cae1_forward.1']
    %18 = vsyncpa [#allocation3], 0
    %19 = vsyncpa [#allocation5], 0
    %20 = vsyncpa [#allocation8], 0
    %21 = vsyncpa [#allocation11], 0
    %22 = vsyncpa [#allocation14], 0
    %23 = vsyncpa [#allocation17], 0
    %24 = vsyncpa [#allocation20], 0
    // Predicated region
    $region2: #{cae1_forward.1} parent=1 // pred_check
      _
    $region3: #{cae1_forward.1} parent=1 // pred_check_branch
      %26 = sbr.rel (0) target = $region5
    $region4: #{cae1_forward.1} parent=1 // pred_region
      _
    $region5: #{cae1_forward.1} parent=1 // pred_fallthru
      _
    // Predicated region
    $region6: #{cae1_forward.1} parent=1 // pred_check
      _
    $region7: #{cae1_forward.1} parent=1 // pred_check_branch
      %28 = sbr.rel (0) target = $region9
    $region8: #{cae1_forward.1} parent=1 // pred_region
      %30 = vsyncadd [#allocation3], 0
      %s31 = sshll.u32 %s1, 4
      %s32 = int_to_ptr.hbm [resolvable:$true] %s31
      %s33 = sshll.u32 [#allocation2], 4
      %s34 = int_to_ptr.vmem [resolvable:$true] %s33
      %39 = dma.hbm_to_vmem [thread:$0]  %s32, 49152, %s34, [#allocation3], 512, 512, 32
    $region9: #{cae1_forward.1} parent=1 // pred_fallthru
      _
    // Predicated region
    $region10: #{cae1_forward.1} parent=1 // pred_check
      _
    $region11: #{cae1_forward.1} parent=1 // pred_check_branch
      %41 = sbr.rel (0) target = $region13
    $region12: #{cae1_forward.1} parent=1 // pred_region
      %43 = vsyncadd [#allocation5], 0
      %s45 = sshll.u32 %s2, 4
      %s46 = int_to_ptr.hbm [resolvable:$true] %s45
      %s47 = sshll.u32 [#allocation4], 4
      %s48 = int_to_ptr.vmem [resolvable:$true] %s47
      %50 = dma.hbm_to_vmem [thread:$0]  %s46, 64, %s48, [#allocation5]
    $region13: #{cae1_forward.1} parent=1 // pred_fallthru
      _
    // Predicated region
    $region14: #{cae1_forward.1} parent=1 // pred_check
      _
    $region15: #{cae1_forward.1} parent=1 // pred_check_branch
      %52 = sbr.rel (0) target = $region17
    $region16: #{cae1_forward.1} parent=1 // pred_region
      %54 = vsyncadd [#allocation5], 0
      %s55 = sshll.u32 %s3, 4
      %s56 = int_to_ptr.hbm [resolvable:$true] %s55
      %s57 = sshll.u32 [#allocation6], 4
      %s58 = int_to_ptr.vmem [resolvable:$true] %s57
      %63 = dma.hbm_to_vmem [thread:$0]  %s56, 8192, %s58, [#allocation5], 128, 128, 8
    $region17: #{cae1_forward.1} parent=1 // pred_fallthru
      _
    // Predicated region
    $region18: #{cae1_forward.1} parent=1 // pred_check
      _
    $region19: #{cae1_forward.1} parent=1 // pred_check_branch
      %65 = sbr.rel (0) target = $region21
    $region20: #{cae1_forward.1} parent=1 // pred_region
      %67 = vsyncadd [#allocation8], 0
      %s69 = sshll.u32 %s4, 4
      %s70 = int_to_ptr.hbm [resolvable:$true] %s69
      %s71 = sshll.u32 [#allocation7], 4
      %s72 = int_to_ptr.vmem [resolvable:$true] %s71
      %74 = dma.hbm_to_vmem [thread:$0]  %s70, 16, %s72, [#allocation8]
    $region21: #{cae1_forward.1} parent=1 // pred_fallthru
      _
    // Predicated region
    $region22: #{cae1_forward.1} parent=1 // pred_check
      _
    $region23: #{cae1_forward.1} parent=1 // pred_check_branch
      %76 = sbr.rel (0) target = $region25
    $region24: #{cae1_forward.1} parent=1 // pred_region
      %78 = vsyncadd [#allocation8], 0
      %s79 = sshll.u32 %s5, 4
      %s80 = int_to_ptr.hbm [resolvable:$true] %s79
      %s81 = sshll.u32 [#allocation9], 4
      %s82 = int_to_ptr.vmem [resolvable:$true] %s81
      %87 = dma.hbm_to_vmem [thread:$0]  %s80, 2048, %s82, [#allocation8], 128, 128, 8
    $region25: #{cae1_forward.1} parent=1 // pred_fallthru
      _
    // Predicated region
    $region26: #{cae1_forward.1} parent=1 // pred_check
      _
    $region27: #{cae1_forward.1} parent=1 // pred_check_branch
      %89 = sbr.rel (0) target = $region29
    $region28: #{cae1_forward.1} parent=1 // pred_region
      %91 = vsyncadd [#allocation11], 0
      %s93 = sshll.u32 %s6, 4
      %s94 = int_to_ptr.hbm [resolvable:$true] %s93
      %s95 = sshll.u32 [#allocation10], 4
      %s96 = int_to_ptr.vmem [resolvable:$true] %s95
      %98 = dma.hbm_to_vmem [thread:$0]  %s94, 16, %s96, [#allocation11]
    $region29: #{cae1_forward.1} parent=1 // pred_fallthru
      _
    // Predicated region
    $region30: #{cae1_forward.1} parent=1 // pred_check
      _
    $region31: #{cae1_forward.1} parent=1 // pred_check_branch
      %100 = sbr.rel (0) target = $region33
    $region32: #{cae1_forward.1} parent=1 // pred_region
      %102 = vsyncadd [#allocation11], 0
      %s103 = sshll.u32 %s7, 4
      %s104 = int_to_ptr.hbm [resolvable:$true] %s103
      %s105 = sshll.u32 [#allocation12], 4
      %s106 = int_to_ptr.vmem [resolvable:$true] %s105
      %111 = dma.hbm_to_vmem [thread:$0]  %s104, 2048, %s106, [#allocation11], 128, 128, 8
    $region33: #{cae1_forward.1} parent=1 // pred_fallthru
      _
    // Predicated region
    $region34: #{cae1_forward.1} parent=1 // pred_check
      _
    $region35: #{cae1_forward.1} parent=1 // pred_check_branch
      %113 = sbr.rel (0) target = $region37
    $region36: #{cae1_forward.1} parent=1 // pred_region
      %115 = vsyncadd [#allocation14], 0
      %s117 = sshll.u32 %s8, 4
      %s118 = int_to_ptr.hbm [resolvable:$true] %s117
      %s119 = sshll.u32 [#allocation13], 4
      %s120 = int_to_ptr.vmem [resolvable:$true] %s119
      %122 = dma.hbm_to_vmem [thread:$0]  %s118, 16, %s120, [#allocation14]
    $region37: #{cae1_forward.1} parent=1 // pred_fallthru
      _
    // Predicated region
    $region38: #{cae1_forward.1} parent=1 // pred_check
      _
    $region39: #{cae1_forward.1} parent=1 // pred_check_branch
      %124 = sbr.rel (0) target = $region41
    $region40: #{cae1_forward.1} parent=1 // pred_region
      %126 = vsyncadd [#allocation14], 0
      %s127 = sshll.u32 %s9, 4
      %s128 = int_to_ptr.hbm [resolvable:$true] %s127
      %s129 = sshll.u32 [#allocation15], 4
      %s130 = int_to_ptr.vmem [resolvable:$true] %s129
      %135 = dma.hbm_to_vmem [thread:$0]  %s128, 8192, %s130, [#allocation14], 512, 512, 32
    $region41: #{cae1_forward.1} parent=1 // pred_fallthru
      _
    // Predicated region
    $region42: #{cae1_forward.1} parent=1 // pred_check
      _
    $region43: #{cae1_forward.1} parent=1 // pred_check_branch
      %137 = sbr.rel (0) target = $region45
    $region44: #{cae1_forward.1} parent=1 // pred_region
      %139 = vsyncadd [#allocation17], 0
      %s141 = sshll.u32 %s10, 4
      %s142 = int_to_ptr.hbm [resolvable:$true] %s141
      %s143 = sshll.u32 [#allocation16], 4
      %s144 = int_to_ptr.vmem [resolvable:$true] %s143
      %146 = dma.hbm_to_vmem [thread:$0]  %s142, 64, %s144, [#allocation17]
    $region45: #{cae1_forward.1} parent=1 // pred_fallthru
      _
    // Predicated region
    $region46: #{cae1_forward.1} parent=1 // pred_check
      _
    $region47: #{cae1_forward.1} parent=1 // pred_check_branch
      %148 = sbr.rel (0) target = $region49
    $region48: #{cae1_forward.1} parent=1 // pred_region
      %150 = vsyncadd [#allocation17], 0
      %s151 = sshll.u32 %s11, 4
      %s152 = int_to_ptr.hbm [resolvable:$true] %s151
      %s153 = sshll.u32 [#allocation18], 4
      %s154 = int_to_ptr.vmem [resolvable:$true] %s153
      %159 = dma.hbm_to_vmem [thread:$0]  %s152, 49152, %s154, [#allocation17], 768, 768, 48
    $region49: #{cae1_forward.1} parent=1 // pred_fallthru
      _
    // Predicated region
    $region50: #{cae1_forward.1} parent=1 // pred_check
      _
    $region51: #{cae1_forward.1} parent=1 // pred_check_branch
      %161 = sbr.rel (0) target = $region53
    $region52: #{cae1_forward.1} parent=1 // pred_region
      %163 = vsyncadd [#allocation20], 0
      %s165 = sshll.u32 %s12, 4
      %s166 = int_to_ptr.hbm [resolvable:$true] %s165
      %s167 = sshll.u32 [#allocation19], 4
      %s168 = int_to_ptr.vmem [resolvable:$true] %s167
      %170 = dma.hbm_to_vmem [thread:$0]  %s166, 96, %s168, [#allocation20]
    $region53: #{cae1_forward.1} parent=1 // pred_fallthru
      _
    // Predicated region
    $region54: #{cae1_forward.1} parent=1 // pred_check
      _
    $region55: #{cae1_forward.1} parent=1 // pred_check_branch
      %172 = sbr.rel (0) target = $region57
    $region56: #{cae1_forward.1} parent=1 // pred_region
      %174 = dma.done [#allocation3], 49152
    $region57: #{cae1_forward.1} parent=1 // pred_fallthru
      _
    // Predicated region
    $region58: #{cae1_forward.1} parent=1 // pred_check
      _
    $region59: #{cae1_forward.1} parent=1 // pred_check_branch
      %176 = sbr.rel (0) target = $region61
    $region60: #{cae1_forward.1} parent=1 // pred_region
      %178 = dma.done [#allocation5], 64
    $region61: #{cae1_forward.1} parent=1 // pred_fallthru
      _
    // Predicated region
    $region62: #{cae1_forward.1} parent=1 // pred_check
      _
    $region63: #{cae1_forward.1} parent=1 // pred_check_branch
      %180 = sbr.rel (0) target = $region65
    $region64: #{cae1_forward.1} parent=1 // pred_region
      %182 = dma.done [#allocation5], 8192
    $region65: #{cae1_forward.1} parent=1 // pred_fallthru
      _
    // Predicated region
    $region66: #{cae1_forward.1} parent=1 // pred_check
      _
    $region67: #{cae1_forward.1} parent=1 // pred_check_branch
      %184 = sbr.rel (0) target = $region69
    $region68: #{cae1_forward.1} parent=1 // pred_region
      %186 = dma.done [#allocation8], 16
    $region69: #{cae1_forward.1} parent=1 // pred_fallthru
      _
    // Predicated region
    $region70: #{cae1_forward.1} parent=1 // pred_check
      _
    $region71: #{cae1_forward.1} parent=1 // pred_check_branch
      %188 = sbr.rel (0) target = $region73
    $region72: #{cae1_forward.1} parent=1 // pred_region
      %190 = dma.done [#allocation8], 2048
    $region73: #{cae1_forward.1} parent=1 // pred_fallthru
      _
    // Predicated region
    $region74: #{cae1_forward.1} parent=1 // pred_check
      _
    $region75: #{cae1_forward.1} parent=1 // pred_check_branch
      %192 = sbr.rel (0) target = $region77
    $region76: #{cae1_forward.1} parent=1 // pred_region
      %194 = dma.done [#allocation11], 16
    $region77: #{cae1_forward.1} parent=1 // pred_fallthru
      _
    // Predicated region
    $region78: #{cae1_forward.1} parent=1 // pred_check
      _
    $region79: #{cae1_forward.1} parent=1 // pred_check_branch
      %196 = sbr.rel (0) target = $region81
    $region80: #{cae1_forward.1} parent=1 // pred_region
      %198 = dma.done [#allocation11], 2048
    $region81: #{cae1_forward.1} parent=1 // pred_fallthru
      _
    // Predicated region
    $region82: #{cae1_forward.1} parent=1 // pred_check
      _
    $region83: #{cae1_forward.1} parent=1 // pred_check_branch
      %200 = sbr.rel (0) target = $region85
    $region84: #{cae1_forward.1} parent=1 // pred_region
      %202 = dma.done [#allocation14], 16
    $region85: #{cae1_forward.1} parent=1 // pred_fallthru
      _
    // Predicated region
    $region86: #{cae1_forward.1} parent=1 // pred_check
      _
    $region87: #{cae1_forward.1} parent=1 // pred_check_branch
      %204 = sbr.rel (0) target = $region89
    $region88: #{cae1_forward.1} parent=1 // pred_region
      %206 = dma.done [#allocation14], 8192
    $region89: #{cae1_forward.1} parent=1 // pred_fallthru
      _
    // Predicated region
    $region90: #{cae1_forward.1} parent=1 // pred_check
      _
    $region91: #{cae1_forward.1} parent=1 // pred_check_branch
      %208 = sbr.rel (0) target = $region93
    $region92: #{cae1_forward.1} parent=1 // pred_region
      %210 = dma.done [#allocation17], 64
    $region93: #{cae1_forward.1} parent=1 // pred_fallthru
      _
    // Predicated region
    $region94: #{cae1_forward.1} parent=1 // pred_check
      _
    $region95: #{cae1_forward.1} parent=1 // pred_check_branch
      %212 = sbr.rel (0) target = $region97
    $region96: #{cae1_forward.1} parent=1 // pred_region
      %214 = dma.done [#allocation17], 49152
    $region97: #{cae1_forward.1} parent=1 // pred_fallthru
      _
    // Predicated region
    $region98: #{cae1_forward.1} parent=1 // pred_check
      _
    $region99: #{cae1_forward.1} parent=1 // pred_check_branch
      %216 = sbr.rel (0) target = $region101
    $region100: #{cae1_forward.1} parent=1 // pred_region
      %218 = dma.done [#allocation20], 96
    $region101: #{cae1_forward.1} parent=1 // pred_fallthru
      _
    %v219 = vld [vmem:[%s0] sm:$0xff]
    %v220 = vld [vmem:[%s0 + $0x8] sm:$0xf]
    %v221 = vld [vmem:[#allocation2] sm:$0xff]
    %v222 = vld [vmem:[#allocation2 + $0x8] sm:$0xff]
    %v223 = vld [vmem:[#allocation2 + $0x10] sm:$0xff]
    %v224 = vld [vmem:[#allocation2 + $0x18] sm:$0xff]
    %v225 = vld [vmem:[#allocation2 + $0x20] sm:$0xff]
    %v226 = vld [vmem:[#allocation2 + $0x28] sm:$0xff]
    %v227 = vld [vmem:[#allocation2 + $0x30] sm:$0xff]
    %v228 = vld [vmem:[#allocation2 + $0x38] sm:$0xff]
    %v229 = vld [vmem:[#allocation2 + $0x40] sm:$0xff]
    %v230 = vld [vmem:[#allocation2 + $0x48] sm:$0xff]
    %v231 = vld [vmem:[#allocation2 + $0x50] sm:$0xff]
    %v232 = vld [vmem:[#allocation2 + $0x58] sm:$0xff]
    %v233 = vld [vmem:[#allocation2 + $0x60] sm:$0xff]
    %v234 = vld [vmem:[#allocation2 + $0x68] sm:$0xff]
    %v235 = vld [vmem:[#allocation2 + $0x70] sm:$0xff]
    %v236 = vld [vmem:[#allocation2 + $0x78] sm:$0xff]
    %v237 = vld [vmem:[#allocation2 + $0x80] sm:$0xff]
    %v238 = vld [vmem:[#allocation2 + $0x88] sm:$0xff]
    %v239 = vld [vmem:[#allocation2 + $0x90] sm:$0xff]
    %v240 = vld [vmem:[#allocation2 + $0x98] sm:$0xff]
    %v241 = vld [vmem:[#allocation2 + $0xa0] sm:$0xff]
    %v242 = vld [vmem:[#allocation2 + $0xa8] sm:$0xff]
    %v243 = vld [vmem:[#allocation2 + $0xb0] sm:$0xff]
    %v244 = vld [vmem:[#allocation2 + $0xb8] sm:$0xff]
    %v245 = vld [vmem:[#allocation2 + $0xc0] sm:$0xff]
    %v246 = vld [vmem:[#allocation2 + $0xc8] sm:$0xff]
    %v247 = vld [vmem:[#allocation2 + $0xd0] sm:$0xff]
    %v248 = vld [vmem:[#allocation2 + $0xd8] sm:$0xff]
    %v249 = vld [vmem:[#allocation2 + $0xe0] sm:$0xff]
    %v250 = vld [vmem:[#allocation2 + $0xe8] sm:$0xff]
    %v251 = vld [vmem:[#allocation2 + $0xf0] sm:$0xff]
    %v252 = vld [vmem:[#allocation2 + $0xf8] sm:$0xff]
    %v253 = vld [vmem:[#allocation2 + $0x100] sm:$0xff]
    %v254 = vld [vmem:[#allocation2 + $0x108] sm:$0xff]
    %v255 = vld [vmem:[#allocation2 + $0x110] sm:$0xff]
    %v256 = vld [vmem:[#allocation2 + $0x118] sm:$0xff]
    %v257 = vld [vmem:[#allocation2 + $0x120] sm:$0xff]
    %v258 = vld [vmem:[#allocation2 + $0x128] sm:$0xff]
    %v259 = vld [vmem:[#allocation2 + $0x130] sm:$0xff]
    %v260 = vld [vmem:[#allocation2 + $0x138] sm:$0xff]
    %v261 = vld [vmem:[#allocation2 + $0x140] sm:$0xff]
    %v262 = vld [vmem:[#allocation2 + $0x148] sm:$0xff]
    %v263 = vld [vmem:[#allocation2 + $0x150] sm:$0xff]
    %v264 = vld [vmem:[#allocation2 + $0x158] sm:$0xff]
    %v265 = vld [vmem:[#allocation2 + $0x160] sm:$0xff]
    %v266 = vld [vmem:[#allocation2 + $0x168] sm:$0xff]
    %v267 = vld [vmem:[#allocation2 + $0x170] sm:$0xff]
    %v268 = vld [vmem:[#allocation2 + $0x178] sm:$0xff]
    %v269 = vld [vmem:[#allocation2 + $0x180] sm:$0xff]
    %v270 = vld [vmem:[#allocation2 + $0x188] sm:$0xff]
    %v271 = vld [vmem:[#allocation2 + $0x190] sm:$0xff]
    %v272 = vld [vmem:[#allocation2 + $0x198] sm:$0xff]
    %v273 = vld [vmem:[#allocation2 + $0x1a0] sm:$0xff]
    %v274 = vld [vmem:[#allocation2 + $0x1a8] sm:$0xff]
    %v275 = vld [vmem:[#allocation2 + $0x1b0] sm:$0xff]
    %v276 = vld [vmem:[#allocation2 + $0x1b8] sm:$0xff]
    %v277 = vld [vmem:[#allocation2 + $0x1c0] sm:$0xff]
    %v278 = vld [vmem:[#allocation2 + $0x1c8] sm:$0xff]
    %v279 = vld [vmem:[#allocation2 + $0x1d0] sm:$0xff]
    %v280 = vld [vmem:[#allocation2 + $0x1d8] sm:$0xff]
    %v281 = vld [vmem:[#allocation2 + $0x1e0] sm:$0xff]
    %v282 = vld [vmem:[#allocation2 + $0x1e8] sm:$0xff]
    %v283 = vld [vmem:[#allocation2 + $0x1f0] sm:$0xff]
    %v284 = vld [vmem:[#allocation2 + $0x1f8] sm:$0xff]
    %v285 = vld [vmem:[#allocation2 + $0x200] sm:$0xff]
    %v286 = vld [vmem:[#allocation2 + $0x208] sm:$0xff]
    %v287 = vld [vmem:[#allocation2 + $0x210] sm:$0xff]
    %v288 = vld [vmem:[#allocation2 + $0x218] sm:$0xff]
    %v289 = vld [vmem:[#allocation2 + $0x220] sm:$0xff]
    %v290 = vld [vmem:[#allocation2 + $0x228] sm:$0xff]
    %v291 = vld [vmem:[#allocation2 + $0x230] sm:$0xff]
    %v292 = vld [vmem:[#allocation2 + $0x238] sm:$0xff]
    %v293 = vld [vmem:[#allocation2 + $0x240] sm:$0xff]
    %v294 = vld [vmem:[#allocation2 + $0x248] sm:$0xff]
    %v295 = vld [vmem:[#allocation2 + $0x250] sm:$0xff]
    %v296 = vld [vmem:[#allocation2 + $0x258] sm:$0xff]
    %v297 = vld [vmem:[#allocation2 + $0x260] sm:$0xff]
    %v298 = vld [vmem:[#allocation2 + $0x268] sm:$0xff]
    %v299 = vld [vmem:[#allocation2 + $0x270] sm:$0xff]
    %v300 = vld [vmem:[#allocation2 + $0x278] sm:$0xff]
    %v301 = vld [vmem:[#allocation2 + $0x280] sm:$0xff]
    %v302 = vld [vmem:[#allocation2 + $0x288] sm:$0xff]
    %v303 = vld [vmem:[#allocation2 + $0x290] sm:$0xff]
    %v304 = vld [vmem:[#allocation2 + $0x298] sm:$0xff]
    %v305 = vld [vmem:[#allocation2 + $0x2a0] sm:$0xff]
    %v306 = vld [vmem:[#allocation2 + $0x2a8] sm:$0xff]
    %v307 = vld [vmem:[#allocation2 + $0x2b0] sm:$0xff]
    %v308 = vld [vmem:[#allocation2 + $0x2b8] sm:$0xff]
    %v309 = vld [vmem:[#allocation2 + $0x2c0] sm:$0xff]
    %v310 = vld [vmem:[#allocation2 + $0x2c8] sm:$0xff]
    %v311 = vld [vmem:[#allocation2 + $0x2d0] sm:$0xff]
    %v312 = vld [vmem:[#allocation2 + $0x2d8] sm:$0xff]
    %v313 = vld [vmem:[#allocation2 + $0x2e0] sm:$0xff]
    %v314 = vld [vmem:[#allocation2 + $0x2e8] sm:$0xff]
    %v315 = vld [vmem:[#allocation2 + $0x2f0] sm:$0xff]
    %v316 = vld [vmem:[#allocation2 + $0x2f8] sm:$0xff]
    %v317 = vld [vmem:[#allocation2 + $0x300] sm:$0xff]
    %v318 = vld [vmem:[#allocation2 + $0x308] sm:$0xff]
    %v319 = vld [vmem:[#allocation2 + $0x310] sm:$0xff]
    %v320 = vld [vmem:[#allocation2 + $0x318] sm:$0xff]
    %v321 = vld [vmem:[#allocation2 + $0x320] sm:$0xff]
    %v322 = vld [vmem:[#allocation2 + $0x328] sm:$0xff]
    %v323 = vld [vmem:[#allocation2 + $0x330] sm:$0xff]
    %v324 = vld [vmem:[#allocation2 + $0x338] sm:$0xff]
    %v325 = vld [vmem:[#allocation2 + $0x340] sm:$0xff]
    %v326 = vld [vmem:[#allocation2 + $0x348] sm:$0xff]
    %v327 = vld [vmem:[#allocation2 + $0x350] sm:$0xff]
    %v328 = vld [vmem:[#allocation2 + $0x358] sm:$0xff]
    %v329 = vld [vmem:[#allocation2 + $0x360] sm:$0xff]
    %v330 = vld [vmem:[#allocation2 + $0x368] sm:$0xff]
    %v331 = vld [vmem:[#allocation2 + $0x370] sm:$0xff]
    %v332 = vld [vmem:[#allocation2 + $0x378] sm:$0xff]
    %v333 = vld [vmem:[#allocation2 + $0x380] sm:$0xff]
    %v334 = vld [vmem:[#allocation2 + $0x388] sm:$0xff]
    %v335 = vld [vmem:[#allocation2 + $0x390] sm:$0xff]
    %v336 = vld [vmem:[#allocation2 + $0x398] sm:$0xff]
    %v337 = vld [vmem:[#allocation2 + $0x3a0] sm:$0xff]
    %v338 = vld [vmem:[#allocation2 + $0x3a8] sm:$0xff]
    %v339 = vld [vmem:[#allocation2 + $0x3b0] sm:$0xff]
    %v340 = vld [vmem:[#allocation2 + $0x3b8] sm:$0xff]
    %v341 = vld [vmem:[#allocation2 + $0x3c0] sm:$0xff]
    %v342 = vld [vmem:[#allocation2 + $0x3c8] sm:$0xff]
    %v343 = vld [vmem:[#allocation2 + $0x3d0] sm:$0xff]
    %v344 = vld [vmem:[#allocation2 + $0x3d8] sm:$0xff]
    %v345 = vld [vmem:[#allocation2 + $0x3e0] sm:$0xff]
    %v346 = vld [vmem:[#allocation2 + $0x3e8] sm:$0xff]
    %v347 = vld [vmem:[#allocation2 + $0x3f0] sm:$0xff]
    %v348 = vld [vmem:[#allocation2 + $0x3f8] sm:$0xff]
    %v349 = vld [vmem:[#allocation2 + $0x400] sm:$0xff]
    %v350 = vld [vmem:[#allocation2 + $0x408] sm:$0xff]
    %v351 = vld [vmem:[#allocation2 + $0x410] sm:$0xff]
    %v352 = vld [vmem:[#allocation2 + $0x418] sm:$0xff]
    %v353 = vld [vmem:[#allocation2 + $0x420] sm:$0xff]
    %v354 = vld [vmem:[#allocation2 + $0x428] sm:$0xff]
    %v355 = vld [vmem:[#allocation2 + $0x430] sm:$0xff]
    %v356 = vld [vmem:[#allocation2 + $0x438] sm:$0xff]
    %v357 = vld [vmem:[#allocation2 + $0x440] sm:$0xff]
    %v358 = vld [vmem:[#allocation2 + $0x448] sm:$0xff]
    %v359 = vld [vmem:[#allocation2 + $0x450] sm:$0xff]
    %v360 = vld [vmem:[#allocation2 + $0x458] sm:$0xff]
    %v361 = vld [vmem:[#allocation2 + $0x460] sm:$0xff]
    %v362 = vld [vmem:[#allocation2 + $0x468] sm:$0xff]
    %v363 = vld [vmem:[#allocation2 + $0x470] sm:$0xff]
    %v364 = vld [vmem:[#allocation2 + $0x478] sm:$0xff]
    %v365 = vld [vmem:[#allocation2 + $0x480] sm:$0xff]
    %v366 = vld [vmem:[#allocation2 + $0x488] sm:$0xff]
    %v367 = vld [vmem:[#allocation2 + $0x490] sm:$0xff]
    %v368 = vld [vmem:[#allocation2 + $0x498] sm:$0xff]
    %v369 = vld [vmem:[#allocation2 + $0x4a0] sm:$0xff]
    %v370 = vld [vmem:[#allocation2 + $0x4a8] sm:$0xff]
    %v371 = vld [vmem:[#allocation2 + $0x4b0] sm:$0xff]
    %v372 = vld [vmem:[#allocation2 + $0x4b8] sm:$0xff]
    %v373 = vld [vmem:[#allocation2 + $0x4c0] sm:$0xff]
    %v374 = vld [vmem:[#allocation2 + $0x4c8] sm:$0xff]
    %v375 = vld [vmem:[#allocation2 + $0x4d0] sm:$0xff]
    %v376 = vld [vmem:[#allocation2 + $0x4d8] sm:$0xff]
    %v377 = vld [vmem:[#allocation2 + $0x4e0] sm:$0xff]
    %v378 = vld [vmem:[#allocation2 + $0x4e8] sm:$0xff]
    %v379 = vld [vmem:[#allocation2 + $0x4f0] sm:$0xff]
    %v380 = vld [vmem:[#allocation2 + $0x4f8] sm:$0xff]
    %v381 = vld [vmem:[#allocation2 + $0x500] sm:$0xff]
    %v382 = vld [vmem:[#allocation2 + $0x508] sm:$0xff]
    %v383 = vld [vmem:[#allocation2 + $0x510] sm:$0xff]
    %v384 = vld [vmem:[#allocation2 + $0x518] sm:$0xff]
    %v385 = vld [vmem:[#allocation2 + $0x520] sm:$0xff]
    %v386 = vld [vmem:[#allocation2 + $0x528] sm:$0xff]
    %v387 = vld [vmem:[#allocation2 + $0x530] sm:$0xff]
    %v388 = vld [vmem:[#allocation2 + $0x538] sm:$0xff]
    %v389 = vld [vmem:[#allocation2 + $0x540] sm:$0xff]
    %v390 = vld [vmem:[#allocation2 + $0x548] sm:$0xff]
    %v391 = vld [vmem:[#allocation2 + $0x550] sm:$0xff]
    %v392 = vld [vmem:[#allocation2 + $0x558] sm:$0xff]
    %v393 = vld [vmem:[#allocation2 + $0x560] sm:$0xff]
    %v394 = vld [vmem:[#allocation2 + $0x568] sm:$0xff]
    %v395 = vld [vmem:[#allocation2 + $0x570] sm:$0xff]
    %v396 = vld [vmem:[#allocation2 + $0x578] sm:$0xff]
    %v397 = vld [vmem:[#allocation2 + $0x580] sm:$0xff]
    %v398 = vld [vmem:[#allocation2 + $0x588] sm:$0xff]
    %v399 = vld [vmem:[#allocation2 + $0x590] sm:$0xff]
    %v400 = vld [vmem:[#allocation2 + $0x598] sm:$0xff]
    %v401 = vld [vmem:[#allocation2 + $0x5a0] sm:$0xff]
    %v402 = vld [vmem:[#allocation2 + $0x5a8] sm:$0xff]
    %v403 = vld [vmem:[#allocation2 + $0x5b0] sm:$0xff]
    %v404 = vld [vmem:[#allocation2 + $0x5b8] sm:$0xff]
    %v405 = vld [vmem:[#allocation2 + $0x5c0] sm:$0xff]
    %v406 = vld [vmem:[#allocation2 + $0x5c8] sm:$0xff]
    %v407 = vld [vmem:[#allocation2 + $0x5d0] sm:$0xff]
    %v408 = vld [vmem:[#allocation2 + $0x5d8] sm:$0xff]
    %v409 = vld [vmem:[#allocation2 + $0x5e0] sm:$0xff]
    %v410 = vld [vmem:[#allocation2 + $0x5e8] sm:$0xff]
    %v411 = vld [vmem:[#allocation2 + $0x5f0] sm:$0xff]
    %v412 = vld [vmem:[#allocation2 + $0x5f8] sm:$0xff]
    %v413 = vld [vmem:[#allocation2 + $0x600] sm:$0xff]
    %v414 = vld [vmem:[#allocation2 + $0x608] sm:$0xff]
    %v415 = vld [vmem:[#allocation2 + $0x610] sm:$0xff]
    %v416 = vld [vmem:[#allocation2 + $0x618] sm:$0xff]
    %v417 = vld [vmem:[#allocation2 + $0x620] sm:$0xff]
    %v418 = vld [vmem:[#allocation2 + $0x628] sm:$0xff]
    %v419 = vld [vmem:[#allocation2 + $0x630] sm:$0xff]
    %v420 = vld [vmem:[#allocation2 + $0x638] sm:$0xff]
    %v421 = vld [vmem:[#allocation2 + $0x640] sm:$0xff]
    %v422 = vld [vmem:[#allocation2 + $0x648] sm:$0xff]
    %v423 = vld [vmem:[#allocation2 + $0x650] sm:$0xff]
    %v424 = vld [vmem:[#allocation2 + $0x658] sm:$0xff]
    %v425 = vld [vmem:[#allocation2 + $0x660] sm:$0xff]
    %v426 = vld [vmem:[#allocation2 + $0x668] sm:$0xff]
    %v427 = vld [vmem:[#allocation2 + $0x670] sm:$0xff]
    %v428 = vld [vmem:[#allocation2 + $0x678] sm:$0xff]
    %v429 = vld [vmem:[#allocation2 + $0x680] sm:$0xff]
    %v430 = vld [vmem:[#allocation2 + $0x688] sm:$0xff]
    %v431 = vld [vmem:[#allocation2 + $0x690] sm:$0xff]
    %v432 = vld [vmem:[#allocation2 + $0x698] sm:$0xff]
    %v433 = vld [vmem:[#allocation2 + $0x6a0] sm:$0xff]
    %v434 = vld [vmem:[#allocation2 + $0x6a8] sm:$0xff]
    %v435 = vld [vmem:[#allocation2 + $0x6b0] sm:$0xff]
    %v436 = vld [vmem:[#allocation2 + $0x6b8] sm:$0xff]
    %v437 = vld [vmem:[#allocation2 + $0x6c0] sm:$0xff]
    %v438 = vld [vmem:[#allocation2 + $0x6c8] sm:$0xff]
    %v439 = vld [vmem:[#allocation2 + $0x6d0] sm:$0xff]
    %v440 = vld [vmem:[#allocation2 + $0x6d8] sm:$0xff]
    %v441 = vld [vmem:[#allocation2 + $0x6e0] sm:$0xff]
    %v442 = vld [vmem:[#allocation2 + $0x6e8] sm:$0xff]
    %v443 = vld [vmem:[#allocation2 + $0x6f0] sm:$0xff]
    %v444 = vld [vmem:[#allocation2 + $0x6f8] sm:$0xff]
    %v445 = vld [vmem:[#allocation2 + $0x700] sm:$0xff]
    %v446 = vld [vmem:[#allocation2 + $0x708] sm:$0xff]
    %v447 = vld [vmem:[#allocation2 + $0x710] sm:$0xff]
    %v448 = vld [vmem:[#allocation2 + $0x718] sm:$0xff]
    %v449 = vld [vmem:[#allocation2 + $0x720] sm:$0xff]
    %v450 = vld [vmem:[#allocation2 + $0x728] sm:$0xff]
    %v451 = vld [vmem:[#allocation2 + $0x730] sm:$0xff]
    %v452 = vld [vmem:[#allocation2 + $0x738] sm:$0xff]
    %v453 = vld [vmem:[#allocation2 + $0x740] sm:$0xff]
    %v454 = vld [vmem:[#allocation2 + $0x748] sm:$0xff]
    %v455 = vld [vmem:[#allocation2 + $0x750] sm:$0xff]
    %v456 = vld [vmem:[#allocation2 + $0x758] sm:$0xff]
    %v457 = vld [vmem:[#allocation2 + $0x760] sm:$0xff]
    %v458 = vld [vmem:[#allocation2 + $0x768] sm:$0xff]
    %v459 = vld [vmem:[#allocation2 + $0x770] sm:$0xff]
    %v460 = vld [vmem:[#allocation2 + $0x778] sm:$0xff]
    %v461 = vld [vmem:[#allocation2 + $0x780] sm:$0xff]
    %v462 = vld [vmem:[#allocation2 + $0x788] sm:$0xff]
    %v463 = vld [vmem:[#allocation2 + $0x790] sm:$0xff]
    %v464 = vld [vmem:[#allocation2 + $0x798] sm:$0xff]
    %v465 = vld [vmem:[#allocation2 + $0x7a0] sm:$0xff]
    %v466 = vld [vmem:[#allocation2 + $0x7a8] sm:$0xff]
    %v467 = vld [vmem:[#allocation2 + $0x7b0] sm:$0xff]
    %v468 = vld [vmem:[#allocation2 + $0x7b8] sm:$0xff]
    %v469 = vld [vmem:[#allocation2 + $0x7c0] sm:$0xff]
    %v470 = vld [vmem:[#allocation2 + $0x7c8] sm:$0xff]
    %v471 = vld [vmem:[#allocation2 + $0x7d0] sm:$0xff]
    %v472 = vld [vmem:[#allocation2 + $0x7d8] sm:$0xff]
    %v473 = vld [vmem:[#allocation2 + $0x7e0] sm:$0xff]
    %v474 = vld [vmem:[#allocation2 + $0x7e8] sm:$0xff]
    %v475 = vld [vmem:[#allocation2 + $0x7f0] sm:$0xff]
    %v476 = vld [vmem:[#allocation2 + $0x7f8] sm:$0xff]
    %v477 = vld [vmem:[#allocation2 + $0x800] sm:$0xff]
    %v478 = vld [vmem:[#allocation2 + $0x808] sm:$0xff]
    %v479 = vld [vmem:[#allocation2 + $0x810] sm:$0xff]
    %v480 = vld [vmem:[#allocation2 + $0x818] sm:$0xff]
    %v481 = vld [vmem:[#allocation2 + $0x820] sm:$0xff]
    %v482 = vld [vmem:[#allocation2 + $0x828] sm:$0xff]
    %v483 = vld [vmem:[#allocation2 + $0x830] sm:$0xff]
    %v484 = vld [vmem:[#allocation2 + $0x838] sm:$0xff]
    %v485 = vld [vmem:[#allocation2 + $0x840] sm:$0xff]
    %v486 = vld [vmem:[#allocation2 + $0x848] sm:$0xff]
    %v487 = vld [vmem:[#allocation2 + $0x850] sm:$0xff]
    %v488 = vld [vmem:[#allocation2 + $0x858] sm:$0xff]
    %v489 = vld [vmem:[#allocation2 + $0x860] sm:$0xff]
    %v490 = vld [vmem:[#allocation2 + $0x868] sm:$0xff]
    %v491 = vld [vmem:[#allocation2 + $0x870] sm:$0xff]
    %v492 = vld [vmem:[#allocation2 + $0x878] sm:$0xff]
    %v493 = vld [vmem:[#allocation2 + $0x880] sm:$0xff]
    %v494 = vld [vmem:[#allocation2 + $0x888] sm:$0xff]
    %v495 = vld [vmem:[#allocation2 + $0x890] sm:$0xff]
    %v496 = vld [vmem:[#allocation2 + $0x898] sm:$0xff]
    %v497 = vld [vmem:[#allocation2 + $0x8a0] sm:$0xff]
    %v498 = vld [vmem:[#allocation2 + $0x8a8] sm:$0xff]
    %v499 = vld [vmem:[#allocation2 + $0x8b0] sm:$0xff]
    %v500 = vld [vmem:[#allocation2 + $0x8b8] sm:$0xff]
    %v501 = vld [vmem:[#allocation2 + $0x8c0] sm:$0xff]
    %v502 = vld [vmem:[#allocation2 + $0x8c8] sm:$0xff]
    %v503 = vld [vmem:[#allocation2 + $0x8d0] sm:$0xff]
    %v504 = vld [vmem:[#allocation2 + $0x8d8] sm:$0xff]
    %v505 = vld [vmem:[#allocation2 + $0x8e0] sm:$0xff]
    %v506 = vld [vmem:[#allocation2 + $0x8e8] sm:$0xff]
    %v507 = vld [vmem:[#allocation2 + $0x8f0] sm:$0xff]
    %v508 = vld [vmem:[#allocation2 + $0x8f8] sm:$0xff]
    %v509 = vld [vmem:[#allocation2 + $0x900] sm:$0xff]
    %v510 = vld [vmem:[#allocation2 + $0x908] sm:$0xff]
    %v511 = vld [vmem:[#allocation2 + $0x910] sm:$0xff]
    %v512 = vld [vmem:[#allocation2 + $0x918] sm:$0xff]
    %v513 = vld [vmem:[#allocation2 + $0x920] sm:$0xff]
    %v514 = vld [vmem:[#allocation2 + $0x928] sm:$0xff]
    %v515 = vld [vmem:[#allocation2 + $0x930] sm:$0xff]
    %v516 = vld [vmem:[#allocation2 + $0x938] sm:$0xff]
    %v517 = vld [vmem:[#allocation2 + $0x940] sm:$0xff]
    %v518 = vld [vmem:[#allocation2 + $0x948] sm:$0xff]
    %v519 = vld [vmem:[#allocation2 + $0x950] sm:$0xff]
    %v520 = vld [vmem:[#allocation2 + $0x958] sm:$0xff]
    %v521 = vld [vmem:[#allocation2 + $0x960] sm:$0xff]
    %v522 = vld [vmem:[#allocation2 + $0x968] sm:$0xff]
    %v523 = vld [vmem:[#allocation2 + $0x970] sm:$0xff]
    %v524 = vld [vmem:[#allocation2 + $0x978] sm:$0xff]
    %v525 = vld [vmem:[#allocation2 + $0x980] sm:$0xff]
    %v526 = vld [vmem:[#allocation2 + $0x988] sm:$0xff]
    %v527 = vld [vmem:[#allocation2 + $0x990] sm:$0xff]
    %v528 = vld [vmem:[#allocation2 + $0x998] sm:$0xff]
    %v529 = vld [vmem:[#allocation2 + $0x9a0] sm:$0xff]
    %v530 = vld [vmem:[#allocation2 + $0x9a8] sm:$0xff]
    %v531 = vld [vmem:[#allocation2 + $0x9b0] sm:$0xff]
    %v532 = vld [vmem:[#allocation2 + $0x9b8] sm:$0xff]
    %v533 = vld [vmem:[#allocation2 + $0x9c0] sm:$0xff]
    %v534 = vld [vmem:[#allocation2 + $0x9c8] sm:$0xff]
    %v535 = vld [vmem:[#allocation2 + $0x9d0] sm:$0xff]
    %v536 = vld [vmem:[#allocation2 + $0x9d8] sm:$0xff]
    %v537 = vld [vmem:[#allocation2 + $0x9e0] sm:$0xff]
    %v538 = vld [vmem:[#allocation2 + $0x9e8] sm:$0xff]
    %v539 = vld [vmem:[#allocation2 + $0x9f0] sm:$0xff]
    %v540 = vld [vmem:[#allocation2 + $0x9f8] sm:$0xff]
    %v541 = vld [vmem:[#allocation2 + $0xa00] sm:$0xff]
    %v542 = vld [vmem:[#allocation2 + $0xa08] sm:$0xff]
    %v543 = vld [vmem:[#allocation2 + $0xa10] sm:$0xff]
    %v544 = vld [vmem:[#allocation2 + $0xa18] sm:$0xff]
    %v545 = vld [vmem:[#allocation2 + $0xa20] sm:$0xff]
    %v546 = vld [vmem:[#allocation2 + $0xa28] sm:$0xff]
    %v547 = vld [vmem:[#allocation2 + $0xa30] sm:$0xff]
    %v548 = vld [vmem:[#allocation2 + $0xa38] sm:$0xff]
    %v549 = vld [vmem:[#allocation2 + $0xa40] sm:$0xff]
    %v550 = vld [vmem:[#allocation2 + $0xa48] sm:$0xff]
    %v551 = vld [vmem:[#allocation2 + $0xa50] sm:$0xff]
    %v552 = vld [vmem:[#allocation2 + $0xa58] sm:$0xff]
    %v553 = vld [vmem:[#allocation2 + $0xa60] sm:$0xff]
    %v554 = vld [vmem:[#allocation2 + $0xa68] sm:$0xff]
    %v555 = vld [vmem:[#allocation2 + $0xa70] sm:$0xff]
    %v556 = vld [vmem:[#allocation2 + $0xa78] sm:$0xff]
    %v557 = vld [vmem:[#allocation2 + $0xa80] sm:$0xff]
    %v558 = vld [vmem:[#allocation2 + $0xa88] sm:$0xff]
    %v559 = vld [vmem:[#allocation2 + $0xa90] sm:$0xff]
    %v560 = vld [vmem:[#allocation2 + $0xa98] sm:$0xff]
    %v561 = vld [vmem:[#allocation2 + $0xaa0] sm:$0xff]
    %v562 = vld [vmem:[#allocation2 + $0xaa8] sm:$0xff]
    %v563 = vld [vmem:[#allocation2 + $0xab0] sm:$0xff]
    %v564 = vld [vmem:[#allocation2 + $0xab8] sm:$0xff]
    %v565 = vld [vmem:[#allocation2 + $0xac0] sm:$0xff]
    %v566 = vld [vmem:[#allocation2 + $0xac8] sm:$0xff]
    %v567 = vld [vmem:[#allocation2 + $0xad0] sm:$0xff]
    %v568 = vld [vmem:[#allocation2 + $0xad8] sm:$0xff]
    %v569 = vld [vmem:[#allocation2 + $0xae0] sm:$0xff]
    %v570 = vld [vmem:[#allocation2 + $0xae8] sm:$0xff]
    %v571 = vld [vmem:[#allocation2 + $0xaf0] sm:$0xff]
    %v572 = vld [vmem:[#allocation2 + $0xaf8] sm:$0xff]
    %v573 = vld [vmem:[#allocation2 + $0xb00] sm:$0xff]
    %v574 = vld [vmem:[#allocation2 + $0xb08] sm:$0xff]
    %v575 = vld [vmem:[#allocation2 + $0xb10] sm:$0xff]
    %v576 = vld [vmem:[#allocation2 + $0xb18] sm:$0xff]
    %v577 = vld [vmem:[#allocation2 + $0xb20] sm:$0xff]
    %v578 = vld [vmem:[#allocation2 + $0xb28] sm:$0xff]
    %v579 = vld [vmem:[#allocation2 + $0xb30] sm:$0xff]
    %v580 = vld [vmem:[#allocation2 + $0xb38] sm:$0xff]
    %v581 = vld [vmem:[#allocation2 + $0xb40] sm:$0xff]
    %v582 = vld [vmem:[#allocation2 + $0xb48] sm:$0xff]
    %v583 = vld [vmem:[#allocation2 + $0xb50] sm:$0xff]
    %v584 = vld [vmem:[#allocation2 + $0xb58] sm:$0xff]
    %v585 = vld [vmem:[#allocation2 + $0xb60] sm:$0xff]
    %v586 = vld [vmem:[#allocation2 + $0xb68] sm:$0xff]
    %v587 = vld [vmem:[#allocation2 + $0xb70] sm:$0xff]
    %v588 = vld [vmem:[#allocation2 + $0xb78] sm:$0xff]
    %v589 = vld [vmem:[#allocation2 + $0xb80] sm:$0xff]
    %v590 = vld [vmem:[#allocation2 + $0xb88] sm:$0xff]
    %v591 = vld [vmem:[#allocation2 + $0xb90] sm:$0xff]
    %v592 = vld [vmem:[#allocation2 + $0xb98] sm:$0xff]
    %v593 = vld [vmem:[#allocation2 + $0xba0] sm:$0xff]
    %v594 = vld [vmem:[#allocation2 + $0xba8] sm:$0xff]
    %v595 = vld [vmem:[#allocation2 + $0xbb0] sm:$0xff]
    %v596 = vld [vmem:[#allocation2 + $0xbb8] sm:$0xff]
    %v597 = vld [vmem:[#allocation2 + $0xbc0] sm:$0xff]
    %v598 = vld [vmem:[#allocation2 + $0xbc8] sm:$0xff]
    %v599 = vld [vmem:[#allocation2 + $0xbd0] sm:$0xff]
    %v600 = vld [vmem:[#allocation2 + $0xbd8] sm:$0xff]
    %v601 = vld [vmem:[#allocation2 + $0xbe0] sm:$0xff]
    %v602 = vld [vmem:[#allocation2 + $0xbe8] sm:$0xff]
    %v603 = vld [vmem:[#allocation2 + $0xbf0] sm:$0xff]
    %v604 = vld [vmem:[#allocation2 + $0xbf8] sm:$0xff]
    %v605 = vld [vmem:[#allocation4] sm:$0xf]
    %v607 = vperm.slane %v605, 0
    %v608 = vperm.slane %v605, 1
    %v609 = vperm.slane %v605, 2
    %v610 = vperm.slane %v605, 3
    %617 = vst [vmem:[#allocation1] ss:$4 sm:$0xff] %v219
    %s618 = scalar_lea.vmem [#allocation1], 32
    %619 = vst [vmem:[%s618] ss:$4 sm:$0xff] %v220
    %v620 = vld.sshfl [vmem:[#allocation1] sm:$0xff pattern:$0x73625140]
    %v621 = vld.sshfl [vmem:[#allocation1 + $0x8] sm:$0xff pattern:$0x73625140]
    %v622 = vld.sshfl [vmem:[#allocation1 + $0x10] sm:$0xff pattern:$0x73625140]
    %v623 = vld.sshfl [vmem:[#allocation1 + $0x18] sm:$0xff pattern:$0x73625140]
    %v624 = vld.sshfl [vmem:[#allocation1 + $0x20] sm:$0xff pattern:$0x73625140]
    %v625 = vld.sshfl [vmem:[#allocation1 + $0x28] sm:$0xff pattern:$0x73625140]
    %632 = vmatpush.msra.mxu0 %v281
    %633 = vmatpush.msra.mxu0 %v277
    %634 = vmatpush.msra.mxu0 %v273
    %635 = vmatpush.msra.mxu0 %v269
    %636 = vmatpush.msra.mxu0 %v265
    %637 = vmatpush.msra.mxu0 %v261
    %638 = vmatpush.msra.mxu0 %v257
    %639 = vmatpush.msra.mxu0 %v253
    %640 = vmatpush.msra.mxu0 %v249
    %641 = vmatpush.msra.mxu0 %v245
    %642 = vmatpush.msra.mxu0 %v241
    %643 = vmatpush.msra.mxu0 %v237
    %644 = vmatpush.msra.mxu0 %v233
    %645 = vmatpush.msra.mxu0 %v229
    %646 = vmatpush.msra.mxu0 %v225
    %647 = vmatpush.msra.mxu0 %v221
    %648 = vmatmul.f32.gmra.mxu0 %v620
    %v649 = vpop.f32.mrf.mxu0
    %v650 = vadd.f32 %v607, %v649
    %651 = vdwg.mxu0
    %652 = vmatpush.msra.mxu0 %v345
    %653 = vmatpush.msra.mxu0 %v341
    %654 = vmatpush.msra.mxu0 %v337
    %655 = vmatpush.msra.mxu0 %v333
    %656 = vmatpush.msra.mxu0 %v329
    %657 = vmatpush.msra.mxu0 %v325
    %658 = vmatpush.msra.mxu0 %v321
    %659 = vmatpush.msra.mxu0 %v317
    %660 = vmatpush.msra.mxu0 %v313
    %661 = vmatpush.msra.mxu0 %v309
    %662 = vmatpush.msra.mxu0 %v305
    %663 = vmatpush.msra.mxu0 %v301
    %664 = vmatpush.msra.mxu0 %v297
    %665 = vmatpush.msra.mxu0 %v293
    %666 = vmatpush.msra.mxu0 %v289
    %667 = vmatpush.msra.mxu0 %v285
    %668 = vmatmul.f32.gmra.mxu0 %v621
    %v669 = vpop.f32.mrf.mxu0
    %v670 = vadd.f32 %v650, %v669
    %671 = vdwg.mxu0
    %672 = vmatpush.msra.mxu0 %v409
    %673 = vmatpush.msra.mxu0 %v405
    %674 = vmatpush.msra.mxu0 %v401
    %675 = vmatpush.msra.mxu0 %v397
    %676 = vmatpush.msra.mxu0 %v393
    %677 = vmatpush.msra.mxu0 %v389
    %678 = vmatpush.msra.mxu0 %v385
    %679 = vmatpush.msra.mxu0 %v381
    %680 = vmatpush.msra.mxu0 %v377
    %681 = vmatpush.msra.mxu0 %v373
    %682 = vmatpush.msra.mxu0 %v369
    %683 = vmatpush.msra.mxu0 %v365
    %684 = vmatpush.msra.mxu0 %v361
    %685 = vmatpush.msra.mxu0 %v357
    %686 = vmatpush.msra.mxu0 %v353
    %687 = vmatpush.msra.mxu0 %v349
    %688 = vmatmul.f32.gmra.mxu0 %v622
    %v689 = vpop.f32.mrf.mxu0
    %v690 = vadd.f32 %v670, %v689
    %691 = vdwg.mxu0
    %692 = vmatpush.msra.mxu0 %v473
    %693 = vmatpush.msra.mxu0 %v469
    %694 = vmatpush.msra.mxu0 %v465
    %695 = vmatpush.msra.mxu0 %v461
    %696 = vmatpush.msra.mxu0 %v457
    %697 = vmatpush.msra.mxu0 %v453
    %698 = vmatpush.msra.mxu0 %v449
    %699 = vmatpush.msra.mxu0 %v445
    %700 = vmatpush.msra.mxu0 %v441
    %701 = vmatpush.msra.mxu0 %v437
    %702 = vmatpush.msra.mxu0 %v433
    %703 = vmatpush.msra.mxu0 %v429
    %704 = vmatpush.msra.mxu0 %v425
    %705 = vmatpush.msra.mxu0 %v421
    %706 = vmatpush.msra.mxu0 %v417
    %707 = vmatpush.msra.mxu0 %v413
    %708 = vmatmul.f32.gmra.mxu0 %v623
    %v709 = vpop.f32.mrf.mxu0
    %v710 = vadd.f32 %v690, %v709
    %711 = vdwg.mxu0
    %712 = vmatpush.msra.mxu0 %v537
    %713 = vmatpush.msra.mxu0 %v533
    %714 = vmatpush.msra.mxu0 %v529
    %715 = vmatpush.msra.mxu0 %v525
    %716 = vmatpush.msra.mxu0 %v521
    %717 = vmatpush.msra.mxu0 %v517
    %718 = vmatpush.msra.mxu0 %v513
    %719 = vmatpush.msra.mxu0 %v509
    %720 = vmatpush.msra.mxu0 %v505
    %721 = vmatpush.msra.mxu0 %v501
    %722 = vmatpush.msra.mxu0 %v497
    %723 = vmatpush.msra.mxu0 %v493
    %724 = vmatpush.msra.mxu0 %v489
    %725 = vmatpush.msra.mxu0 %v485
    %726 = vmatpush.msra.mxu0 %v481
    %727 = vmatpush.msra.mxu0 %v477
    %728 = vmatmul.f32.gmra.mxu0 %v624
    %v729 = vpop.f32.mrf.mxu0
    %v730 = vadd.f32 %v710, %v729
    %731 = vdwg.mxu0
    %732 = vmatpush.msra.mxu0 %v601
    %733 = vmatpush.msra.mxu0 %v597
    %734 = vmatpush.msra.mxu0 %v593
    %735 = vmatpush.msra.mxu0 %v589
    %736 = vmatpush.msra.mxu0 %v585
    %737 = vmatpush.msra.mxu0 %v581
    %738 = vmatpush.msra.mxu0 %v577
    %739 = vmatpush.msra.mxu0 %v573
    %740 = vmatpush.msra.mxu0 %v569
    %741 = vmatpush.msra.mxu0 %v565
    %742 = vmatpush.msra.mxu0 %v561
    %743 = vmatpush.msra.mxu0 %v557
    %744 = vmatpush.msra.mxu0 %v553
    %745 = vmatpush.msra.mxu0 %v549
    %746 = vmatpush.msra.mxu0 %v545
    %747 = vmatpush.msra.mxu0 %v541
    %748 = vmatmul.f32.gmra.mxu0 %v625
    %v749 = vpop.f32.mrf.mxu0
    %v750 = vadd.f32 %v730, %v749
    %751 = vdwg.mxu0
    %752 = vmatpush.msra.mxu0 %v282
    %753 = vmatpush.msra.mxu0 %v278
    %754 = vmatpush.msra.mxu0 %v274
    %755 = vmatpush.msra.mxu0 %v270
    %756 = vmatpush.msra.mxu0 %v266
    %757 = vmatpush.msra.mxu0 %v262
    %758 = vmatpush.msra.mxu0 %v258
    %759 = vmatpush.msra.mxu0 %v254
    %760 = vmatpush.msra.mxu0 %v250
    %761 = vmatpush.msra.mxu0 %v246
    %762 = vmatpush.msra.mxu0 %v242
    %763 = vmatpush.msra.mxu0 %v238
    %764 = vmatpush.msra.mxu0 %v234
    %765 = vmatpush.msra.mxu0 %v230
    %766 = vmatpush.msra.mxu0 %v226
    %767 = vmatpush.msra.mxu0 %v222
    %768 = vmatmul.f32.gmra.mxu0 %v620
    %v769 = vpop.f32.mrf.mxu0
    %v770 = vadd.f32 %v608, %v769
    %771 = vdwg.mxu0
    %772 = vmatpush.msra.mxu0 %v346
    %773 = vmatpush.msra.mxu0 %v342
    %774 = vmatpush.msra.mxu0 %v338
    %775 = vmatpush.msra.mxu0 %v334
    %776 = vmatpush.msra.mxu0 %v330
    %777 = vmatpush.msra.mxu0 %v326
    %778 = vmatpush.msra.mxu0 %v322
    %779 = vmatpush.msra.mxu0 %v318
    %780 = vmatpush.msra.mxu0 %v314
    %781 = vmatpush.msra.mxu0 %v310
    %782 = vmatpush.msra.mxu0 %v306
    %783 = vmatpush.msra.mxu0 %v302
    %784 = vmatpush.msra.mxu0 %v298
    %785 = vmatpush.msra.mxu0 %v294
    %786 = vmatpush.msra.mxu0 %v290
    %787 = vmatpush.msra.mxu0 %v286
    %788 = vmatmul.f32.gmra.mxu0 %v621
    %v789 = vpop.f32.mrf.mxu0
    %v790 = vadd.f32 %v770, %v789
    %791 = vdwg.mxu0
    %792 = vmatpush.msra.mxu0 %v410
    %793 = vmatpush.msra.mxu0 %v406
    %794 = vmatpush.msra.mxu0 %v402
    %795 = vmatpush.msra.mxu0 %v398
    %796 = vmatpush.msra.mxu0 %v394
    %797 = vmatpush.msra.mxu0 %v390
    %798 = vmatpush.msra.mxu0 %v386
    %799 = vmatpush.msra.mxu0 %v382
    %800 = vmatpush.msra.mxu0 %v378
    %801 = vmatpush.msra.mxu0 %v374
    %802 = vmatpush.msra.mxu0 %v370
    %803 = vmatpush.msra.mxu0 %v366
    %804 = vmatpush.msra.mxu0 %v362
    %805 = vmatpush.msra.mxu0 %v358
    %806 = vmatpush.msra.mxu0 %v354
    %807 = vmatpush.msra.mxu0 %v350
    %808 = vmatmul.f32.gmra.mxu0 %v622
    %v809 = vpop.f32.mrf.mxu0
    %v810 = vadd.f32 %v790, %v809
    %811 = vdwg.mxu0
    %812 = vmatpush.msra.mxu0 %v474
    %813 = vmatpush.msra.mxu0 %v470
    %814 = vmatpush.msra.mxu0 %v466
    %815 = vmatpush.msra.mxu0 %v462
    %816 = vmatpush.msra.mxu0 %v458
    %817 = vmatpush.msra.mxu0 %v454
    %818 = vmatpush.msra.mxu0 %v450
    %819 = vmatpush.msra.mxu0 %v446
    %820 = vmatpush.msra.mxu0 %v442
    %821 = vmatpush.msra.mxu0 %v438
    %822 = vmatpush.msra.mxu0 %v434
    %823 = vmatpush.msra.mxu0 %v430
    %824 = vmatpush.msra.mxu0 %v426
    %825 = vmatpush.msra.mxu0 %v422
    %826 = vmatpush.msra.mxu0 %v418
    %827 = vmatpush.msra.mxu0 %v414
    %828 = vmatmul.f32.gmra.mxu0 %v623
    %v829 = vpop.f32.mrf.mxu0
    %v830 = vadd.f32 %v810, %v829
    %831 = vdwg.mxu0
    %832 = vmatpush.msra.mxu0 %v538
    %833 = vmatpush.msra.mxu0 %v534
    %834 = vmatpush.msra.mxu0 %v530
    %835 = vmatpush.msra.mxu0 %v526
    %836 = vmatpush.msra.mxu0 %v522
    %837 = vmatpush.msra.mxu0 %v518
    %838 = vmatpush.msra.mxu0 %v514
    %839 = vmatpush.msra.mxu0 %v510
    %840 = vmatpush.msra.mxu0 %v506
    %841 = vmatpush.msra.mxu0 %v502
    %842 = vmatpush.msra.mxu0 %v498
    %843 = vmatpush.msra.mxu0 %v494
    %844 = vmatpush.msra.mxu0 %v490
    %845 = vmatpush.msra.mxu0 %v486
    %846 = vmatpush.msra.mxu0 %v482
    %847 = vmatpush.msra.mxu0 %v478
    %848 = vmatmul.f32.gmra.mxu0 %v624
    %v849 = vpop.f32.mrf.mxu0
    %v850 = vadd.f32 %v830, %v849
    %851 = vdwg.mxu0
    %852 = vmatpush.msra.mxu0 %v602
    %853 = vmatpush.msra.mxu0 %v598
    %854 = vmatpush.msra.mxu0 %v594
    %855 = vmatpush.msra.mxu0 %v590
    %856 = vmatpush.msra.mxu0 %v586
    %857 = vmatpush.msra.mxu0 %v582
    %858 = vmatpush.msra.mxu0 %v578
    %859 = vmatpush.msra.mxu0 %v574
    %860 = vmatpush.msra.mxu0 %v570
    %861 = vmatpush.msra.mxu0 %v566
    %862 = vmatpush.msra.mxu0 %v562
    %863 = vmatpush.msra.mxu0 %v558
    %864 = vmatpush.msra.mxu0 %v554
    %865 = vmatpush.msra.mxu0 %v550
    %866 = vmatpush.msra.mxu0 %v546
    %867 = vmatpush.msra.mxu0 %v542
    %868 = vmatmul.f32.gmra.mxu0 %v625
    %v869 = vpop.f32.mrf.mxu0
    %v870 = vadd.f32 %v850, %v869
    %871 = vdwg.mxu0
    %872 = vmatpush.msra.mxu0 %v283
    %873 = vmatpush.msra.mxu0 %v279
    %874 = vmatpush.msra.mxu0 %v275
    %875 = vmatpush.msra.mxu0 %v271
    %876 = vmatpush.msra.mxu0 %v267
    %877 = vmatpush.msra.mxu0 %v263
    %878 = vmatpush.msra.mxu0 %v259
    %879 = vmatpush.msra.mxu0 %v255
    %880 = vmatpush.msra.mxu0 %v251
    %881 = vmatpush.msra.mxu0 %v247
    %882 = vmatpush.msra.mxu0 %v243
    %883 = vmatpush.msra.mxu0 %v239
    %884 = vmatpush.msra.mxu0 %v235
    %885 = vmatpush.msra.mxu0 %v231
    %886 = vmatpush.msra.mxu0 %v227
    %887 = vmatpush.msra.mxu0 %v223
    %888 = vmatmul.f32.gmra.mxu0 %v620
    %v889 = vpop.f32.mrf.mxu0
    %v890 = vadd.f32 %v609, %v889
    %891 = vdwg.mxu0
    %892 = vmatpush.msra.mxu0 %v347
    %893 = vmatpush.msra.mxu0 %v343
    %894 = vmatpush.msra.mxu0 %v339
    %895 = vmatpush.msra.mxu0 %v335
    %896 = vmatpush.msra.mxu0 %v331
    %897 = vmatpush.msra.mxu0 %v327
    %898 = vmatpush.msra.mxu0 %v323
    %899 = vmatpush.msra.mxu0 %v319
    %900 = vmatpush.msra.mxu0 %v315
    %901 = vmatpush.msra.mxu0 %v311
    %902 = vmatpush.msra.mxu0 %v307
    %903 = vmatpush.msra.mxu0 %v303
    %904 = vmatpush.msra.mxu0 %v299
    %905 = vmatpush.msra.mxu0 %v295
    %906 = vmatpush.msra.mxu0 %v291
    %907 = vmatpush.msra.mxu0 %v287
    %908 = vmatmul.f32.gmra.mxu0 %v621
    %v909 = vpop.f32.mrf.mxu0
    %v910 = vadd.f32 %v890, %v909
    %911 = vdwg.mxu0
    %912 = vmatpush.msra.mxu0 %v411
    %913 = vmatpush.msra.mxu0 %v407
    %914 = vmatpush.msra.mxu0 %v403
    %915 = vmatpush.msra.mxu0 %v399
    %916 = vmatpush.msra.mxu0 %v395
    %917 = vmatpush.msra.mxu0 %v391
    %918 = vmatpush.msra.mxu0 %v387
    %919 = vmatpush.msra.mxu0 %v383
    %920 = vmatpush.msra.mxu0 %v379
    %921 = vmatpush.msra.mxu0 %v375
    %922 = vmatpush.msra.mxu0 %v371
    %923 = vmatpush.msra.mxu0 %v367
    %924 = vmatpush.msra.mxu0 %v363
    %925 = vmatpush.msra.mxu0 %v359
    %926 = vmatpush.msra.mxu0 %v355
    %927 = vmatpush.msra.mxu0 %v351
    %928 = vmatmul.f32.gmra.mxu0 %v622
    %v929 = vpop.f32.mrf.mxu0
    %v930 = vadd.f32 %v910, %v929
    %931 = vdwg.mxu0
    %932 = vmatpush.msra.mxu0 %v475
    %933 = vmatpush.msra.mxu0 %v471
    %934 = vmatpush.msra.mxu0 %v467
    %935 = vmatpush.msra.mxu0 %v463
    %936 = vmatpush.msra.mxu0 %v459
    %937 = vmatpush.msra.mxu0 %v455
    %938 = vmatpush.msra.mxu0 %v451
    %939 = vmatpush.msra.mxu0 %v447
    %940 = vmatpush.msra.mxu0 %v443
    %941 = vmatpush.msra.mxu0 %v439
    %942 = vmatpush.msra.mxu0 %v435
    %943 = vmatpush.msra.mxu0 %v431
    %944 = vmatpush.msra.mxu0 %v427
    %945 = vmatpush.msra.mxu0 %v423
    %946 = vmatpush.msra.mxu0 %v419
    %947 = vmatpush.msra.mxu0 %v415
    %948 = vmatmul.f32.gmra.mxu0 %v623
    %v949 = vpop.f32.mrf.mxu0
    %v950 = vadd.f32 %v930, %v949
    %951 = vdwg.mxu0
    %952 = vmatpush.msra.mxu0 %v539
    %953 = vmatpush.msra.mxu0 %v535
    %954 = vmatpush.msra.mxu0 %v531
    %955 = vmatpush.msra.mxu0 %v527
    %956 = vmatpush.msra.mxu0 %v523
    %957 = vmatpush.msra.mxu0 %v519
    %958 = vmatpush.msra.mxu0 %v515
    %959 = vmatpush.msra.mxu0 %v511
    %960 = vmatpush.msra.mxu0 %v507
    %961 = vmatpush.msra.mxu0 %v503
    %962 = vmatpush.msra.mxu0 %v499
    %963 = vmatpush.msra.mxu0 %v495
    %964 = vmatpush.msra.mxu0 %v491
    %965 = vmatpush.msra.mxu0 %v487
    %966 = vmatpush.msra.mxu0 %v483
    %967 = vmatpush.msra.mxu0 %v479
    %968 = vmatmul.f32.gmra.mxu0 %v624
    %v969 = vpop.f32.mrf.mxu0
    %v970 = vadd.f32 %v950, %v969
    %971 = vdwg.mxu0
    %972 = vmatpush.msra.mxu0 %v603
    %973 = vmatpush.msra.mxu0 %v599
    %974 = vmatpush.msra.mxu0 %v595
    %975 = vmatpush.msra.mxu0 %v591
    %976 = vmatpush.msra.mxu0 %v587
    %977 = vmatpush.msra.mxu0 %v583
    %978 = vmatpush.msra.mxu0 %v579
    %979 = vmatpush.msra.mxu0 %v575
    %980 = vmatpush.msra.mxu0 %v571
    %981 = vmatpush.msra.mxu0 %v567
    %982 = vmatpush.msra.mxu0 %v563
    %983 = vmatpush.msra.mxu0 %v559
    %984 = vmatpush.msra.mxu0 %v555
    %985 = vmatpush.msra.mxu0 %v551
    %986 = vmatpush.msra.mxu0 %v547
    %987 = vmatpush.msra.mxu0 %v543
    %988 = vmatmul.f32.gmra.mxu0 %v625
    %v989 = vpop.f32.mrf.mxu0
    %v990 = vadd.f32 %v970, %v989
    %991 = vdwg.mxu0
    %992 = vmatpush.msra.mxu0 %v284
    %993 = vmatpush.msra.mxu0 %v280
    %994 = vmatpush.msra.mxu0 %v276
    %995 = vmatpush.msra.mxu0 %v272
    %996 = vmatpush.msra.mxu0 %v268
    %997 = vmatpush.msra.mxu0 %v264
    %998 = vmatpush.msra.mxu0 %v260
    %999 = vmatpush.msra.mxu0 %v256
    %1000 = vmatpush.msra.mxu0 %v252
    %1001 = vmatpush.msra.mxu0 %v248
    %1002 = vmatpush.msra.mxu0 %v244
    %1003 = vmatpush.msra.mxu0 %v240
    %1004 = vmatpush.msra.mxu0 %v236
    %1005 = vmatpush.msra.mxu0 %v232
    %1006 = vmatpush.msra.mxu0 %v228
    %1007 = vmatpush.msra.mxu0 %v224
    %1008 = vmatmul.f32.gmra.mxu0 %v620
    %v1009 = vpop.f32.mrf.mxu0
    %v1010 = vadd.f32 %v610, %v1009
    %1011 = vdwg.mxu0
    %1012 = vmatpush.msra.mxu0 %v348
    %1013 = vmatpush.msra.mxu0 %v344
    %1014 = vmatpush.msra.mxu0 %v340
    %1015 = vmatpush.msra.mxu0 %v336
    %1016 = vmatpush.msra.mxu0 %v332
    %1017 = vmatpush.msra.mxu0 %v328
    %1018 = vmatpush.msra.mxu0 %v324
    %1019 = vmatpush.msra.mxu0 %v320
    %1020 = vmatpush.msra.mxu0 %v316
    %1021 = vmatpush.msra.mxu0 %v312
    %1022 = vmatpush.msra.mxu0 %v308
    %1023 = vmatpush.msra.mxu0 %v304
    %1024 = vmatpush.msra.mxu0 %v300
    %1025 = vmatpush.msra.mxu0 %v296
    %1026 = vmatpush.msra.mxu0 %v292
    %1027 = vmatpush.msra.mxu0 %v288
    %1028 = vmatmul.f32.gmra.mxu0 %v621
    %v1029 = vpop.f32.mrf.mxu0
    %v1030 = vadd.f32 %v1010, %v1029
    %1031 = vdwg.mxu0
    %1032 = vmatpush.msra.mxu0 %v412
    %1033 = vmatpush.msra.mxu0 %v408
    %1034 = vmatpush.msra.mxu0 %v404
    %1035 = vmatpush.msra.mxu0 %v400
    %1036 = vmatpush.msra.mxu0 %v396
    %1037 = vmatpush.msra.mxu0 %v392
    %1038 = vmatpush.msra.mxu0 %v388
    %1039 = vmatpush.msra.mxu0 %v384
    %1040 = vmatpush.msra.mxu0 %v380
    %1041 = vmatpush.msra.mxu0 %v376
    %1042 = vmatpush.msra.mxu0 %v372
    %1043 = vmatpush.msra.mxu0 %v368
    %1044 = vmatpush.msra.mxu0 %v364
    %1045 = vmatpush.msra.mxu0 %v360
    %1046 = vmatpush.msra.mxu0 %v356
    %1047 = vmatpush.msra.mxu0 %v352
    %1048 = vmatmul.f32.gmra.mxu0 %v622
    %v1049 = vpop.f32.mrf.mxu0
    %v1050 = vadd.f32 %v1030, %v1049
    %1051 = vdwg.mxu0
    %1052 = vmatpush.msra.mxu0 %v476
    %1053 = vmatpush.msra.mxu0 %v472
    %1054 = vmatpush.msra.mxu0 %v468
    %1055 = vmatpush.msra.mxu0 %v464
    %1056 = vmatpush.msra.mxu0 %v460
    %1057 = vmatpush.msra.mxu0 %v456
    %1058 = vmatpush.msra.mxu0 %v452
    %1059 = vmatpush.msra.mxu0 %v448
    %1060 = vmatpush.msra.mxu0 %v444
    %1061 = vmatpush.msra.mxu0 %v440
    %1062 = vmatpush.msra.mxu0 %v436
    %1063 = vmatpush.msra.mxu0 %v432
    %1064 = vmatpush.msra.mxu0 %v428
    %1065 = vmatpush.msra.mxu0 %v424
    %1066 = vmatpush.msra.mxu0 %v420
    %1067 = vmatpush.msra.mxu0 %v416
    %1068 = vmatmul.f32.gmra.mxu0 %v623
    %v1069 = vpop.f32.mrf.mxu0
    %v1070 = vadd.f32 %v1050, %v1069
    %1071 = vdwg.mxu0
    %1072 = vmatpush.msra.mxu0 %v540
    %1073 = vmatpush.msra.mxu0 %v536
    %1074 = vmatpush.msra.mxu0 %v532
    %1075 = vmatpush.msra.mxu0 %v528
    %1076 = vmatpush.msra.mxu0 %v524
    %1077 = vmatpush.msra.mxu0 %v520
    %1078 = vmatpush.msra.mxu0 %v516
    %1079 = vmatpush.msra.mxu0 %v512
    %1080 = vmatpush.msra.mxu0 %v508
    %1081 = vmatpush.msra.mxu0 %v504
    %1082 = vmatpush.msra.mxu0 %v500
    %1083 = vmatpush.msra.mxu0 %v496
    %1084 = vmatpush.msra.mxu0 %v492
    %1085 = vmatpush.msra.mxu0 %v488
    %1086 = vmatpush.msra.mxu0 %v484
    %1087 = vmatpush.msra.mxu0 %v480
    %1088 = vmatmul.f32.gmra.mxu0 %v624
    %v1089 = vpop.f32.mrf.mxu0
    %v1090 = vadd.f32 %v1070, %v1089
    %1091 = vdwg.mxu0
    %1092 = vmatpush.msra.mxu0 %v604
    %1093 = vmatpush.msra.mxu0 %v600
    %1094 = vmatpush.msra.mxu0 %v596
    %1095 = vmatpush.msra.mxu0 %v592
    %1096 = vmatpush.msra.mxu0 %v588
    %1097 = vmatpush.msra.mxu0 %v584
    %1098 = vmatpush.msra.mxu0 %v580
    %1099 = vmatpush.msra.mxu0 %v576
    %1100 = vmatpush.msra.mxu0 %v572
    %1101 = vmatpush.msra.mxu0 %v568
    %1102 = vmatpush.msra.mxu0 %v564
    %1103 = vmatpush.msra.mxu0 %v560
    %1104 = vmatpush.msra.mxu0 %v556
    %1105 = vmatpush.msra.mxu0 %v552
    %1106 = vmatpush.msra.mxu0 %v548
    %1107 = vmatpush.msra.mxu0 %v544
    %1108 = vmatmul.f32.gmra.mxu0 %v625
    %v1109 = vpop.f32.mrf.mxu0
    %v1110 = vadd.f32 %v1090, %v1109
    %1111 = vdwg.mxu0
    %v1112 = vmax.f32 %v750, 0.0
    %v1113 = vmax.f32 %v870, 0.0
    %v1114 = vmax.f32 %v990, 0.0
    %v1115 = vmax.f32 %v1110, 0.0
    %v1116 = vld [vmem:[#allocation6] sm:$0xff]
    %v1117 = vld [vmem:[#allocation6 + $0x8] sm:$0xff]
    %v1118 = vld [vmem:[#allocation6 + $0x10] sm:$0xff]
    %v1119 = vld [vmem:[#allocation6 + $0x18] sm:$0xff]
    %v1120 = vld [vmem:[#allocation6 + $0x20] sm:$0xff]
    %v1121 = vld [vmem:[#allocation6 + $0x28] sm:$0xff]
    %v1122 = vld [vmem:[#allocation6 + $0x30] sm:$0xff]
    %v1123 = vld [vmem:[#allocation6 + $0x38] sm:$0xff]
    %v1124 = vld [vmem:[#allocation6 + $0x40] sm:$0xff]
    %v1125 = vld [vmem:[#allocation6 + $0x48] sm:$0xff]
    %v1126 = vld [vmem:[#allocation6 + $0x50] sm:$0xff]
    %v1127 = vld [vmem:[#allocation6 + $0x58] sm:$0xff]
    %v1128 = vld [vmem:[#allocation6 + $0x60] sm:$0xff]
    %v1129 = vld [vmem:[#allocation6 + $0x68] sm:$0xff]
    %v1130 = vld [vmem:[#allocation6 + $0x70] sm:$0xff]
    %v1131 = vld [vmem:[#allocation6 + $0x78] sm:$0xff]
    %v1132 = vld [vmem:[#allocation6 + $0x80] sm:$0xff]
    %v1133 = vld [vmem:[#allocation6 + $0x88] sm:$0xff]
    %v1134 = vld [vmem:[#allocation6 + $0x90] sm:$0xff]
    %v1135 = vld [vmem:[#allocation6 + $0x98] sm:$0xff]
    %v1136 = vld [vmem:[#allocation6 + $0xa0] sm:$0xff]
    %v1137 = vld [vmem:[#allocation6 + $0xa8] sm:$0xff]
    %v1138 = vld [vmem:[#allocation6 + $0xb0] sm:$0xff]
    %v1139 = vld [vmem:[#allocation6 + $0xb8] sm:$0xff]
    %v1140 = vld [vmem:[#allocation6 + $0xc0] sm:$0xff]
    %v1141 = vld [vmem:[#allocation6 + $0xc8] sm:$0xff]
    %v1142 = vld [vmem:[#allocation6 + $0xd0] sm:$0xff]
    %v1143 = vld [vmem:[#allocation6 + $0xd8] sm:$0xff]
    %v1144 = vld [vmem:[#allocation6 + $0xe0] sm:$0xff]
    %v1145 = vld [vmem:[#allocation6 + $0xe8] sm:$0xff]
    %v1146 = vld [vmem:[#allocation6 + $0xf0] sm:$0xff]
    %v1147 = vld [vmem:[#allocation6 + $0xf8] sm:$0xff]
    %v1148 = vld [vmem:[#allocation6 + $0x100] sm:$0xff]
    %v1149 = vld [vmem:[#allocation6 + $0x108] sm:$0xff]
    %v1150 = vld [vmem:[#allocation6 + $0x110] sm:$0xff]
    %v1151 = vld [vmem:[#allocation6 + $0x118] sm:$0xff]
    %v1152 = vld [vmem:[#allocation6 + $0x120] sm:$0xff]
    %v1153 = vld [vmem:[#allocation6 + $0x128] sm:$0xff]
    %v1154 = vld [vmem:[#allocation6 + $0x130] sm:$0xff]
    %v1155 = vld [vmem:[#allocation6 + $0x138] sm:$0xff]
    %v1156 = vld [vmem:[#allocation6 + $0x140] sm:$0xff]
    %v1157 = vld [vmem:[#allocation6 + $0x148] sm:$0xff]
    %v1158 = vld [vmem:[#allocation6 + $0x150] sm:$0xff]
    %v1159 = vld [vmem:[#allocation6 + $0x158] sm:$0xff]
    %v1160 = vld [vmem:[#allocation6 + $0x160] sm:$0xff]
    %v1161 = vld [vmem:[#allocation6 + $0x168] sm:$0xff]
    %v1162 = vld [vmem:[#allocation6 + $0x170] sm:$0xff]
    %v1163 = vld [vmem:[#allocation6 + $0x178] sm:$0xff]
    %v1164 = vld [vmem:[#allocation6 + $0x180] sm:$0xff]
    %v1165 = vld [vmem:[#allocation6 + $0x188] sm:$0xff]
    %v1166 = vld [vmem:[#allocation6 + $0x190] sm:$0xff]
    %v1167 = vld [vmem:[#allocation6 + $0x198] sm:$0xff]
    %v1168 = vld [vmem:[#allocation6 + $0x1a0] sm:$0xff]
    %v1169 = vld [vmem:[#allocation6 + $0x1a8] sm:$0xff]
    %v1170 = vld [vmem:[#allocation6 + $0x1b0] sm:$0xff]
    %v1171 = vld [vmem:[#allocation6 + $0x1b8] sm:$0xff]
    %v1172 = vld [vmem:[#allocation6 + $0x1c0] sm:$0xff]
    %v1173 = vld [vmem:[#allocation6 + $0x1c8] sm:$0xff]
    %v1174 = vld [vmem:[#allocation6 + $0x1d0] sm:$0xff]
    %v1175 = vld [vmem:[#allocation6 + $0x1d8] sm:$0xff]
    %v1176 = vld [vmem:[#allocation6 + $0x1e0] sm:$0xff]
    %v1177 = vld [vmem:[#allocation6 + $0x1e8] sm:$0xff]
    %v1178 = vld [vmem:[#allocation6 + $0x1f0] sm:$0xff]
    %v1179 = vld [vmem:[#allocation6 + $0x1f8] sm:$0xff]
    %v1180 = vld [vmem:[#allocation7] sm:$0x1]
    %v1182 = vperm.slane %v1180, 0
    %1184 = vmatpush.msra.mxu0 %v1131
    %1185 = vmatpush.msra.mxu0 %v1130
    %1186 = vmatpush.msra.mxu0 %v1129
    %1187 = vmatpush.msra.mxu0 %v1128
    %1188 = vmatpush.msra.mxu0 %v1127
    %1189 = vmatpush.msra.mxu0 %v1126
    %1190 = vmatpush.msra.mxu0 %v1125
    %1191 = vmatpush.msra.mxu0 %v1124
    %1192 = vmatpush.msra.mxu0 %v1123
    %1193 = vmatpush.msra.mxu0 %v1122
    %1194 = vmatpush.msra.mxu0 %v1121
    %1195 = vmatpush.msra.mxu0 %v1120
    %1196 = vmatpush.msra.mxu0 %v1119
    %1197 = vmatpush.msra.mxu0 %v1118
    %1198 = vmatpush.msra.mxu0 %v1117
    %1199 = vmatpush.msra.mxu0 %v1116
    %1200 = vmatmul.f32.gmra.mxu0 %v1112
    %v1201 = vpop.f32.mrf.mxu0
    %v1202 = vadd.f32 %v1182, %v1201
    %1203 = vdwg.mxu0
    %1204 = vmatpush.msra.mxu0 %v1147
    %1205 = vmatpush.msra.mxu0 %v1146
    %1206 = vmatpush.msra.mxu0 %v1145
    %1207 = vmatpush.msra.mxu0 %v1144
    %1208 = vmatpush.msra.mxu0 %v1143
    %1209 = vmatpush.msra.mxu0 %v1142
    %1210 = vmatpush.msra.mxu0 %v1141
    %1211 = vmatpush.msra.mxu0 %v1140
    %1212 = vmatpush.msra.mxu0 %v1139
    %1213 = vmatpush.msra.mxu0 %v1138
    %1214 = vmatpush.msra.mxu0 %v1137
    %1215 = vmatpush.msra.mxu0 %v1136
    %1216 = vmatpush.msra.mxu0 %v1135
    %1217 = vmatpush.msra.mxu0 %v1134
    %1218 = vmatpush.msra.mxu0 %v1133
    %1219 = vmatpush.msra.mxu0 %v1132
    %1220 = vmatmul.f32.gmra.mxu0 %v1113
    %v1221 = vpop.f32.mrf.mxu0
    %v1222 = vadd.f32 %v1202, %v1221
    %1223 = vdwg.mxu0
    %1224 = vmatpush.msra.mxu0 %v1163
    %1225 = vmatpush.msra.mxu0 %v1162
    %1226 = vmatpush.msra.mxu0 %v1161
    %1227 = vmatpush.msra.mxu0 %v1160
    %1228 = vmatpush.msra.mxu0 %v1159
    %1229 = vmatpush.msra.mxu0 %v1158
    %1230 = vmatpush.msra.mxu0 %v1157
    %1231 = vmatpush.msra.mxu0 %v1156
    %1232 = vmatpush.msra.mxu0 %v1155
    %1233 = vmatpush.msra.mxu0 %v1154
    %1234 = vmatpush.msra.mxu0 %v1153
    %1235 = vmatpush.msra.mxu0 %v1152
    %1236 = vmatpush.msra.mxu0 %v1151
    %1237 = vmatpush.msra.mxu0 %v1150
    %1238 = vmatpush.msra.mxu0 %v1149
    %1239 = vmatpush.msra.mxu0 %v1148
    %1240 = vmatmul.f32.gmra.mxu0 %v1114
    %v1241 = vpop.f32.mrf.mxu0
    %v1242 = vadd.f32 %v1222, %v1241
    %1243 = vdwg.mxu0
    %1244 = vmatpush.msra.mxu0 %v1179
    %1245 = vmatpush.msra.mxu0 %v1178
    %1246 = vmatpush.msra.mxu0 %v1177
    %1247 = vmatpush.msra.mxu0 %v1176
    %1248 = vmatpush.msra.mxu0 %v1175
    %1249 = vmatpush.msra.mxu0 %v1174
    %1250 = vmatpush.msra.mxu0 %v1173
    %1251 = vmatpush.msra.mxu0 %v1172
    %1252 = vmatpush.msra.mxu0 %v1171
    %1253 = vmatpush.msra.mxu0 %v1170
    %1254 = vmatpush.msra.mxu0 %v1169
    %1255 = vmatpush.msra.mxu0 %v1168
    %1256 = vmatpush.msra.mxu0 %v1167
    %1257 = vmatpush.msra.mxu0 %v1166
    %1258 = vmatpush.msra.mxu0 %v1165
    %1259 = vmatpush.msra.mxu0 %v1164
    %1260 = vmatmul.f32.gmra.mxu0 %v1115
    %v1261 = vpop.f32.mrf.mxu0
    %v1262 = vadd.f32 %v1242, %v1261
    %1263 = vdwg.mxu0
    %v1264 = vmax.f32 %v1262, 0.0
    %v1265 = vld [vmem:[#allocation9] sm:$0xff]
    %v1266 = vld [vmem:[#allocation9 + $0x8] sm:$0xff]
    %v1267 = vld [vmem:[#allocation9 + $0x10] sm:$0xff]
    %v1268 = vld [vmem:[#allocation9 + $0x18] sm:$0xff]
    %v1269 = vld [vmem:[#allocation9 + $0x20] sm:$0xff]
    %v1270 = vld [vmem:[#allocation9 + $0x28] sm:$0xff]
    %v1271 = vld [vmem:[#allocation9 + $0x30] sm:$0xff]
    %v1272 = vld [vmem:[#allocation9 + $0x38] sm:$0xff]
    %v1273 = vld [vmem:[#allocation9 + $0x40] sm:$0xff]
    %v1274 = vld [vmem:[#allocation9 + $0x48] sm:$0xff]
    %v1275 = vld [vmem:[#allocation9 + $0x50] sm:$0xff]
    %v1276 = vld [vmem:[#allocation9 + $0x58] sm:$0xff]
    %v1277 = vld [vmem:[#allocation9 + $0x60] sm:$0xff]
    %v1278 = vld [vmem:[#allocation9 + $0x68] sm:$0xff]
    %v1279 = vld [vmem:[#allocation9 + $0x70] sm:$0xff]
    %v1280 = vld [vmem:[#allocation9 + $0x78] sm:$0xff]
    %v1281 = vld [vmem:[#allocation10] sm:$0x1]
    %v1283 = vperm.slane %v1281, 0
    %1285 = vmatpush.msra.mxu0 %v1280
    %1286 = vmatpush.msra.mxu0 %v1279
    %1287 = vmatpush.msra.mxu0 %v1278
    %1288 = vmatpush.msra.mxu0 %v1277
    %1289 = vmatpush.msra.mxu0 %v1276
    %1290 = vmatpush.msra.mxu0 %v1275
    %1291 = vmatpush.msra.mxu0 %v1274
    %1292 = vmatpush.msra.mxu0 %v1273
    %1293 = vmatpush.msra.mxu0 %v1272
    %1294 = vmatpush.msra.mxu0 %v1271
    %1295 = vmatpush.msra.mxu0 %v1270
    %1296 = vmatpush.msra.mxu0 %v1269
    %1297 = vmatpush.msra.mxu0 %v1268
    %1298 = vmatpush.msra.mxu0 %v1267
    %1299 = vmatpush.msra.mxu0 %v1266
    %1300 = vmatpush.msra.mxu0 %v1265
    %1301 = vmatmul.f32.gmra.mxu0 %v1264
    %v1302 = vpop.f32.mrf.mxu0
    %v1303 = vadd.f32 %v1283, %v1302
    %1304 = vdwg.mxu0
    %v1305 = vld [vmem:[#allocation12] sm:$0xff]
    %v1306 = vld [vmem:[#allocation12 + $0x8] sm:$0xff]
    %v1307 = vld [vmem:[#allocation12 + $0x10] sm:$0xff]
    %v1308 = vld [vmem:[#allocation12 + $0x18] sm:$0xff]
    %v1309 = vld [vmem:[#allocation12 + $0x20] sm:$0xff]
    %v1310 = vld [vmem:[#allocation12 + $0x28] sm:$0xff]
    %v1311 = vld [vmem:[#allocation12 + $0x30] sm:$0xff]
    %v1312 = vld [vmem:[#allocation12 + $0x38] sm:$0xff]
    %v1313 = vld [vmem:[#allocation12 + $0x40] sm:$0xff]
    %v1314 = vld [vmem:[#allocation12 + $0x48] sm:$0xff]
    %v1315 = vld [vmem:[#allocation12 + $0x50] sm:$0xff]
    %v1316 = vld [vmem:[#allocation12 + $0x58] sm:$0xff]
    %v1317 = vld [vmem:[#allocation12 + $0x60] sm:$0xff]
    %v1318 = vld [vmem:[#allocation12 + $0x68] sm:$0xff]
    %v1319 = vld [vmem:[#allocation12 + $0x70] sm:$0xff]
    %v1320 = vld [vmem:[#allocation12 + $0x78] sm:$0xff]
    %v1321 = vld [vmem:[#allocation13] sm:$0x1]
    %v1323 = vperm.slane %v1321, 0
    %1325 = vmatpush.msra.mxu0 %v1320
    %1326 = vmatpush.msra.mxu0 %v1319
    %1327 = vmatpush.msra.mxu0 %v1318
    %1328 = vmatpush.msra.mxu0 %v1317
    %1329 = vmatpush.msra.mxu0 %v1316
    %1330 = vmatpush.msra.mxu0 %v1315
    %1331 = vmatpush.msra.mxu0 %v1314
    %1332 = vmatpush.msra.mxu0 %v1313
    %1333 = vmatpush.msra.mxu0 %v1312
    %1334 = vmatpush.msra.mxu0 %v1311
    %1335 = vmatpush.msra.mxu0 %v1310
    %1336 = vmatpush.msra.mxu0 %v1309
    %1337 = vmatpush.msra.mxu0 %v1308
    %1338 = vmatpush.msra.mxu0 %v1307
    %1339 = vmatpush.msra.mxu0 %v1306
    %1340 = vmatpush.msra.mxu0 %v1305
    %1341 = vmatmul.f32.gmra.mxu0 %v1303
    %v1342 = vpop.f32.mrf.mxu0
    %v1343 = vadd.f32 %v1323, %v1342
    %1344 = vdwg.mxu0
    %v1345 = vmax.f32 %v1343, 0.0
    %v1346 = vld [vmem:[#allocation15] sm:$0xff]
    %v1347 = vld [vmem:[#allocation15 + $0x8] sm:$0xff]
    %v1348 = vld [vmem:[#allocation15 + $0x10] sm:$0xff]
    %v1349 = vld [vmem:[#allocation15 + $0x18] sm:$0xff]
    %v1350 = vld [vmem:[#allocation15 + $0x20] sm:$0xff]
    %v1351 = vld [vmem:[#allocation15 + $0x28] sm:$0xff]
    %v1352 = vld [vmem:[#allocation15 + $0x30] sm:$0xff]
    %v1353 = vld [vmem:[#allocation15 + $0x38] sm:$0xff]
    %v1354 = vld [vmem:[#allocation15 + $0x40] sm:$0xff]
    %v1355 = vld [vmem:[#allocation15 + $0x48] sm:$0xff]
    %v1356 = vld [vmem:[#allocation15 + $0x50] sm:$0xff]
    %v1357 = vld [vmem:[#allocation15 + $0x58] sm:$0xff]
    %v1358 = vld [vmem:[#allocation15 + $0x60] sm:$0xff]
    %v1359 = vld [vmem:[#allocation15 + $0x68] sm:$0xff]
    %v1360 = vld [vmem:[#allocation15 + $0x70] sm:$0xff]
    %v1361 = vld [vmem:[#allocation15 + $0x78] sm:$0xff]
    %v1362 = vld [vmem:[#allocation15 + $0x80] sm:$0xff]
    %v1363 = vld [vmem:[#allocation15 + $0x88] sm:$0xff]
    %v1364 = vld [vmem:[#allocation15 + $0x90] sm:$0xff]
    %v1365 = vld [vmem:[#allocation15 + $0x98] sm:$0xff]
    %v1366 = vld [vmem:[#allocation15 + $0xa0] sm:$0xff]
    %v1367 = vld [vmem:[#allocation15 + $0xa8] sm:$0xff]
    %v1368 = vld [vmem:[#allocation15 + $0xb0] sm:$0xff]
    %v1369 = vld [vmem:[#allocation15 + $0xb8] sm:$0xff]
    %v1370 = vld [vmem:[#allocation15 + $0xc0] sm:$0xff]
    %v1371 = vld [vmem:[#allocation15 + $0xc8] sm:$0xff]
    %v1372 = vld [vmem:[#allocation15 + $0xd0] sm:$0xff]
    %v1373 = vld [vmem:[#allocation15 + $0xd8] sm:$0xff]
    %v1374 = vld [vmem:[#allocation15 + $0xe0] sm:$0xff]
    %v1375 = vld [vmem:[#allocation15 + $0xe8] sm:$0xff]
    %v1376 = vld [vmem:[#allocation15 + $0xf0] sm:$0xff]
    %v1377 = vld [vmem:[#allocation15 + $0xf8] sm:$0xff]
    %v1378 = vld [vmem:[#allocation15 + $0x100] sm:$0xff]
    %v1379 = vld [vmem:[#allocation15 + $0x108] sm:$0xff]
    %v1380 = vld [vmem:[#allocation15 + $0x110] sm:$0xff]
    %v1381 = vld [vmem:[#allocation15 + $0x118] sm:$0xff]
    %v1382 = vld [vmem:[#allocation15 + $0x120] sm:$0xff]
    %v1383 = vld [vmem:[#allocation15 + $0x128] sm:$0xff]
    %v1384 = vld [vmem:[#allocation15 + $0x130] sm:$0xff]
    %v1385 = vld [vmem:[#allocation15 + $0x138] sm:$0xff]
    %v1386 = vld [vmem:[#allocation15 + $0x140] sm:$0xff]
    %v1387 = vld [vmem:[#allocation15 + $0x148] sm:$0xff]
    %v1388 = vld [vmem:[#allocation15 + $0x150] sm:$0xff]
    %v1389 = vld [vmem:[#allocation15 + $0x158] sm:$0xff]
    %v1390 = vld [vmem:[#allocation15 + $0x160] sm:$0xff]
    %v1391 = vld [vmem:[#allocation15 + $0x168] sm:$0xff]
    %v1392 = vld [vmem:[#allocation15 + $0x170] sm:$0xff]
    %v1393 = vld [vmem:[#allocation15 + $0x178] sm:$0xff]
    %v1394 = vld [vmem:[#allocation15 + $0x180] sm:$0xff]
    %v1395 = vld [vmem:[#allocation15 + $0x188] sm:$0xff]
    %v1396 = vld [vmem:[#allocation15 + $0x190] sm:$0xff]
    %v1397 = vld [vmem:[#allocation15 + $0x198] sm:$0xff]
    %v1398 = vld [vmem:[#allocation15 + $0x1a0] sm:$0xff]
    %v1399 = vld [vmem:[#allocation15 + $0x1a8] sm:$0xff]
    %v1400 = vld [vmem:[#allocation15 + $0x1b0] sm:$0xff]
    %v1401 = vld [vmem:[#allocation15 + $0x1b8] sm:$0xff]
    %v1402 = vld [vmem:[#allocation15 + $0x1c0] sm:$0xff]
    %v1403 = vld [vmem:[#allocation15 + $0x1c8] sm:$0xff]
    %v1404 = vld [vmem:[#allocation15 + $0x1d0] sm:$0xff]
    %v1405 = vld [vmem:[#allocation15 + $0x1d8] sm:$0xff]
    %v1406 = vld [vmem:[#allocation15 + $0x1e0] sm:$0xff]
    %v1407 = vld [vmem:[#allocation15 + $0x1e8] sm:$0xff]
    %v1408 = vld [vmem:[#allocation15 + $0x1f0] sm:$0xff]
    %v1409 = vld [vmem:[#allocation15 + $0x1f8] sm:$0xff]
    %v1410 = vld [vmem:[#allocation16] sm:$0xf]
    %v1412 = vperm.slane %v1410, 0
    %v1413 = vperm.slane %v1410, 1
    %v1414 = vperm.slane %v1410, 2
    %v1415 = vperm.slane %v1410, 3
    %1420 = vmatpush.msra.mxu0 %v1406
    %1421 = vmatpush.msra.mxu0 %v1402
    %1422 = vmatpush.msra.mxu0 %v1398
    %1423 = vmatpush.msra.mxu0 %v1394
    %1424 = vmatpush.msra.mxu0 %v1390
    %1425 = vmatpush.msra.mxu0 %v1386
    %1426 = vmatpush.msra.mxu0 %v1382
    %1427 = vmatpush.msra.mxu0 %v1378
    %1428 = vmatpush.msra.mxu0 %v1374
    %1429 = vmatpush.msra.mxu0 %v1370
    %1430 = vmatpush.msra.mxu0 %v1366
    %1431 = vmatpush.msra.mxu0 %v1362
    %1432 = vmatpush.msra.mxu0 %v1358
    %1433 = vmatpush.msra.mxu0 %v1354
    %1434 = vmatpush.msra.mxu0 %v1350
    %1435 = vmatpush.msra.mxu0 %v1346
    %1436 = vmatmul.f32.gmra.mxu0 %v1345
    %v1437 = vpop.f32.mrf.mxu0
    %v1438 = vadd.f32 %v1412, %v1437
    %1439 = vdwg.mxu0
    %1440 = vmatpush.msra.mxu0 %v1407
    %1441 = vmatpush.msra.mxu0 %v1403
    %1442 = vmatpush.msra.mxu0 %v1399
    %1443 = vmatpush.msra.mxu0 %v1395
    %1444 = vmatpush.msra.mxu0 %v1391
    %1445 = vmatpush.msra.mxu0 %v1387
    %1446 = vmatpush.msra.mxu0 %v1383
    %1447 = vmatpush.msra.mxu0 %v1379
    %1448 = vmatpush.msra.mxu0 %v1375
    %1449 = vmatpush.msra.mxu0 %v1371
    %1450 = vmatpush.msra.mxu0 %v1367
    %1451 = vmatpush.msra.mxu0 %v1363
    %1452 = vmatpush.msra.mxu0 %v1359
    %1453 = vmatpush.msra.mxu0 %v1355
    %1454 = vmatpush.msra.mxu0 %v1351
    %1455 = vmatpush.msra.mxu0 %v1347
    %1456 = vmatmul.f32.gmra.mxu0 %v1345
    %v1457 = vpop.f32.mrf.mxu0
    %v1458 = vadd.f32 %v1413, %v1457
    %1459 = vdwg.mxu0
    %1460 = vmatpush.msra.mxu0 %v1408
    %1461 = vmatpush.msra.mxu0 %v1404
    %1462 = vmatpush.msra.mxu0 %v1400
    %1463 = vmatpush.msra.mxu0 %v1396
    %1464 = vmatpush.msra.mxu0 %v1392
    %1465 = vmatpush.msra.mxu0 %v1388
    %1466 = vmatpush.msra.mxu0 %v1384
    %1467 = vmatpush.msra.mxu0 %v1380
    %1468 = vmatpush.msra.mxu0 %v1376
    %1469 = vmatpush.msra.mxu0 %v1372
    %1470 = vmatpush.msra.mxu0 %v1368
    %1471 = vmatpush.msra.mxu0 %v1364
    %1472 = vmatpush.msra.mxu0 %v1360
    %1473 = vmatpush.msra.mxu0 %v1356
    %1474 = vmatpush.msra.mxu0 %v1352
    %1475 = vmatpush.msra.mxu0 %v1348
    %1476 = vmatmul.f32.gmra.mxu0 %v1345
    %v1477 = vpop.f32.mrf.mxu0
    %v1478 = vadd.f32 %v1414, %v1477
    %1479 = vdwg.mxu0
    %1480 = vmatpush.msra.mxu0 %v1409
    %1481 = vmatpush.msra.mxu0 %v1405
    %1482 = vmatpush.msra.mxu0 %v1401
    %1483 = vmatpush.msra.mxu0 %v1397
    %1484 = vmatpush.msra.mxu0 %v1393
    %1485 = vmatpush.msra.mxu0 %v1389
    %1486 = vmatpush.msra.mxu0 %v1385
    %1487 = vmatpush.msra.mxu0 %v1381
    %1488 = vmatpush.msra.mxu0 %v1377
    %1489 = vmatpush.msra.mxu0 %v1373
    %1490 = vmatpush.msra.mxu0 %v1369
    %1491 = vmatpush.msra.mxu0 %v1365
    %1492 = vmatpush.msra.mxu0 %v1361
    %1493 = vmatpush.msra.mxu0 %v1357
    %1494 = vmatpush.msra.mxu0 %v1353
    %1495 = vmatpush.msra.mxu0 %v1349
    %1496 = vmatmul.f32.gmra.mxu0 %v1345
    %v1497 = vpop.f32.mrf.mxu0
    %v1498 = vadd.f32 %v1415, %v1497
    %1499 = vdwg.mxu0
    %v1500 = vmax.f32 %v1438, 0.0
    %v1501 = vmax.f32 %v1458, 0.0
    %v1502 = vmax.f32 %v1478, 0.0
    %v1503 = vmax.f32 %v1498, 0.0
    %v1504 = vld [vmem:[#allocation18] sm:$0xff]
    %v1505 = vld [vmem:[#allocation18 + $0x8] sm:$0xff]
    %v1506 = vld [vmem:[#allocation18 + $0x10] sm:$0xff]
    %v1507 = vld [vmem:[#allocation18 + $0x18] sm:$0xff]
    %v1508 = vld [vmem:[#allocation18 + $0x20] sm:$0xff]
    %v1509 = vld [vmem:[#allocation18 + $0x28] sm:$0xff]
    %v1510 = vld [vmem:[#allocation18 + $0x30] sm:$0xff]
    %v1511 = vld [vmem:[#allocation18 + $0x38] sm:$0xff]
    %v1512 = vld [vmem:[#allocation18 + $0x40] sm:$0xff]
    %v1513 = vld [vmem:[#allocation18 + $0x48] sm:$0xff]
    %v1514 = vld [vmem:[#allocation18 + $0x50] sm:$0xff]
    %v1515 = vld [vmem:[#allocation18 + $0x58] sm:$0xff]
    %v1516 = vld [vmem:[#allocation18 + $0x60] sm:$0xff]
    %v1517 = vld [vmem:[#allocation18 + $0x68] sm:$0xff]
    %v1518 = vld [vmem:[#allocation18 + $0x70] sm:$0xff]
    %v1519 = vld [vmem:[#allocation18 + $0x78] sm:$0xff]
    %v1520 = vld [vmem:[#allocation18 + $0x80] sm:$0xff]
    %v1521 = vld [vmem:[#allocation18 + $0x88] sm:$0xff]
    %v1522 = vld [vmem:[#allocation18 + $0x90] sm:$0xff]
    %v1523 = vld [vmem:[#allocation18 + $0x98] sm:$0xff]
    %v1524 = vld [vmem:[#allocation18 + $0xa0] sm:$0xff]
    %v1525 = vld [vmem:[#allocation18 + $0xa8] sm:$0xff]
    %v1526 = vld [vmem:[#allocation18 + $0xb0] sm:$0xff]
    %v1527 = vld [vmem:[#allocation18 + $0xb8] sm:$0xff]
    %v1528 = vld [vmem:[#allocation18 + $0xc0] sm:$0xff]
    %v1529 = vld [vmem:[#allocation18 + $0xc8] sm:$0xff]
    %v1530 = vld [vmem:[#allocation18 + $0xd0] sm:$0xff]
    %v1531 = vld [vmem:[#allocation18 + $0xd8] sm:$0xff]
    %v1532 = vld [vmem:[#allocation18 + $0xe0] sm:$0xff]
    %v1533 = vld [vmem:[#allocation18 + $0xe8] sm:$0xff]
    %v1534 = vld [vmem:[#allocation18 + $0xf0] sm:$0xff]
    %v1535 = vld [vmem:[#allocation18 + $0xf8] sm:$0xff]
    %v1536 = vld [vmem:[#allocation18 + $0x100] sm:$0xff]
    %v1537 = vld [vmem:[#allocation18 + $0x108] sm:$0xff]
    %v1538 = vld [vmem:[#allocation18 + $0x110] sm:$0xff]
    %v1539 = vld [vmem:[#allocation18 + $0x118] sm:$0xff]
    %v1540 = vld [vmem:[#allocation18 + $0x120] sm:$0xff]
    %v1541 = vld [vmem:[#allocation18 + $0x128] sm:$0xff]
    %v1542 = vld [vmem:[#allocation18 + $0x130] sm:$0xff]
    %v1543 = vld [vmem:[#allocation18 + $0x138] sm:$0xff]
    %v1544 = vld [vmem:[#allocation18 + $0x140] sm:$0xff]
    %v1545 = vld [vmem:[#allocation18 + $0x148] sm:$0xff]
    %v1546 = vld [vmem:[#allocation18 + $0x150] sm:$0xff]
    %v1547 = vld [vmem:[#allocation18 + $0x158] sm:$0xff]
    %v1548 = vld [vmem:[#allocation18 + $0x160] sm:$0xff]
    %v1549 = vld [vmem:[#allocation18 + $0x168] sm:$0xff]
    %v1550 = vld [vmem:[#allocation18 + $0x170] sm:$0xff]
    %v1551 = vld [vmem:[#allocation18 + $0x178] sm:$0xff]
    %v1552 = vld [vmem:[#allocation18 + $0x180] sm:$0xff]
    %v1553 = vld [vmem:[#allocation18 + $0x188] sm:$0xff]
    %v1554 = vld [vmem:[#allocation18 + $0x190] sm:$0xff]
    %v1555 = vld [vmem:[#allocation18 + $0x198] sm:$0xff]
    %v1556 = vld [vmem:[#allocation18 + $0x1a0] sm:$0xff]
    %v1557 = vld [vmem:[#allocation18 + $0x1a8] sm:$0xff]
    %v1558 = vld [vmem:[#allocation18 + $0x1b0] sm:$0xff]
    %v1559 = vld [vmem:[#allocation18 + $0x1b8] sm:$0xff]
    %v1560 = vld [vmem:[#allocation18 + $0x1c0] sm:$0xff]
    %v1561 = vld [vmem:[#allocation18 + $0x1c8] sm:$0xff]
    %v1562 = vld [vmem:[#allocation18 + $0x1d0] sm:$0xff]
    %v1563 = vld [vmem:[#allocation18 + $0x1d8] sm:$0xff]
    %v1564 = vld [vmem:[#allocation18 + $0x1e0] sm:$0xff]
    %v1565 = vld [vmem:[#allocation18 + $0x1e8] sm:$0xff]
    %v1566 = vld [vmem:[#allocation18 + $0x1f0] sm:$0xff]
    %v1567 = vld [vmem:[#allocation18 + $0x1f8] sm:$0xff]
    %v1568 = vld [vmem:[#allocation18 + $0x200] sm:$0xff]
    %v1569 = vld [vmem:[#allocation18 + $0x208] sm:$0xff]
    %v1570 = vld [vmem:[#allocation18 + $0x210] sm:$0xff]
    %v1571 = vld [vmem:[#allocation18 + $0x218] sm:$0xff]
    %v1572 = vld [vmem:[#allocation18 + $0x220] sm:$0xff]
    %v1573 = vld [vmem:[#allocation18 + $0x228] sm:$0xff]
    %v1574 = vld [vmem:[#allocation18 + $0x230] sm:$0xff]
    %v1575 = vld [vmem:[#allocation18 + $0x238] sm:$0xff]
    %v1576 = vld [vmem:[#allocation18 + $0x240] sm:$0xff]
    %v1577 = vld [vmem:[#allocation18 + $0x248] sm:$0xff]
    %v1578 = vld [vmem:[#allocation18 + $0x250] sm:$0xff]
    %v1579 = vld [vmem:[#allocation18 + $0x258] sm:$0xff]
    %v1580 = vld [vmem:[#allocation18 + $0x260] sm:$0xff]
    %v1581 = vld [vmem:[#allocation18 + $0x268] sm:$0xff]
    %v1582 = vld [vmem:[#allocation18 + $0x270] sm:$0xff]
    %v1583 = vld [vmem:[#allocation18 + $0x278] sm:$0xff]
    %v1584 = vld [vmem:[#allocation18 + $0x280] sm:$0xff]
    %v1585 = vld [vmem:[#allocation18 + $0x288] sm:$0xff]
    %v1586 = vld [vmem:[#allocation18 + $0x290] sm:$0xff]
    %v1587 = vld [vmem:[#allocation18 + $0x298] sm:$0xff]
    %v1588 = vld [vmem:[#allocation18 + $0x2a0] sm:$0xff]
    %v1589 = vld [vmem:[#allocation18 + $0x2a8] sm:$0xff]
    %v1590 = vld [vmem:[#allocation18 + $0x2b0] sm:$0xff]
    %v1591 = vld [vmem:[#allocation18 + $0x2b8] sm:$0xff]
    %v1592 = vld [vmem:[#allocation18 + $0x2c0] sm:$0xff]
    %v1593 = vld [vmem:[#allocation18 + $0x2c8] sm:$0xff]
    %v1594 = vld [vmem:[#allocation18 + $0x2d0] sm:$0xff]
    %v1595 = vld [vmem:[#allocation18 + $0x2d8] sm:$0xff]
    %v1596 = vld [vmem:[#allocation18 + $0x2e0] sm:$0xff]
    %v1597 = vld [vmem:[#allocation18 + $0x2e8] sm:$0xff]
    %v1598 = vld [vmem:[#allocation18 + $0x2f0] sm:$0xff]
    %v1599 = vld [vmem:[#allocation18 + $0x2f8] sm:$0xff]
    %v1600 = vld [vmem:[#allocation18 + $0x300] sm:$0xff]
    %v1601 = vld [vmem:[#allocation18 + $0x308] sm:$0xff]
    %v1602 = vld [vmem:[#allocation18 + $0x310] sm:$0xff]
    %v1603 = vld [vmem:[#allocation18 + $0x318] sm:$0xff]
    %v1604 = vld [vmem:[#allocation18 + $0x320] sm:$0xff]
    %v1605 = vld [vmem:[#allocation18 + $0x328] sm:$0xff]
    %v1606 = vld [vmem:[#allocation18 + $0x330] sm:$0xff]
    %v1607 = vld [vmem:[#allocation18 + $0x338] sm:$0xff]
    %v1608 = vld [vmem:[#allocation18 + $0x340] sm:$0xff]
    %v1609 = vld [vmem:[#allocation18 + $0x348] sm:$0xff]
    %v1610 = vld [vmem:[#allocation18 + $0x350] sm:$0xff]
    %v1611 = vld [vmem:[#allocation18 + $0x358] sm:$0xff]
    %v1612 = vld [vmem:[#allocation18 + $0x360] sm:$0xff]
    %v1613 = vld [vmem:[#allocation18 + $0x368] sm:$0xff]
    %v1614 = vld [vmem:[#allocation18 + $0x370] sm:$0xff]
    %v1615 = vld [vmem:[#allocation18 + $0x378] sm:$0xff]
    %v1616 = vld [vmem:[#allocation18 + $0x380] sm:$0xff]
    %v1617 = vld [vmem:[#allocation18 + $0x388] sm:$0xff]
    %v1618 = vld [vmem:[#allocation18 + $0x390] sm:$0xff]
    %v1619 = vld [vmem:[#allocation18 + $0x398] sm:$0xff]
    %v1620 = vld [vmem:[#allocation18 + $0x3a0] sm:$0xff]
    %v1621 = vld [vmem:[#allocation18 + $0x3a8] sm:$0xff]
    %v1622 = vld [vmem:[#allocation18 + $0x3b0] sm:$0xff]
    %v1623 = vld [vmem:[#allocation18 + $0x3b8] sm:$0xff]
    %v1624 = vld [vmem:[#allocation18 + $0x3c0] sm:$0xff]
    %v1625 = vld [vmem:[#allocation18 + $0x3c8] sm:$0xff]
    %v1626 = vld [vmem:[#allocation18 + $0x3d0] sm:$0xff]
    %v1627 = vld [vmem:[#allocation18 + $0x3d8] sm:$0xff]
    %v1628 = vld [vmem:[#allocation18 + $0x3e0] sm:$0xff]
    %v1629 = vld [vmem:[#allocation18 + $0x3e8] sm:$0xff]
    %v1630 = vld [vmem:[#allocation18 + $0x3f0] sm:$0xff]
    %v1631 = vld [vmem:[#allocation18 + $0x3f8] sm:$0xff]
    %v1632 = vld [vmem:[#allocation18 + $0x400] sm:$0xff]
    %v1633 = vld [vmem:[#allocation18 + $0x408] sm:$0xff]
    %v1634 = vld [vmem:[#allocation18 + $0x410] sm:$0xff]
    %v1635 = vld [vmem:[#allocation18 + $0x418] sm:$0xff]
    %v1636 = vld [vmem:[#allocation18 + $0x420] sm:$0xff]
    %v1637 = vld [vmem:[#allocation18 + $0x428] sm:$0xff]
    %v1638 = vld [vmem:[#allocation18 + $0x430] sm:$0xff]
    %v1639 = vld [vmem:[#allocation18 + $0x438] sm:$0xff]
    %v1640 = vld [vmem:[#allocation18 + $0x440] sm:$0xff]
    %v1641 = vld [vmem:[#allocation18 + $0x448] sm:$0xff]
    %v1642 = vld [vmem:[#allocation18 + $0x450] sm:$0xff]
    %v1643 = vld [vmem:[#allocation18 + $0x458] sm:$0xff]
    %v1644 = vld [vmem:[#allocation18 + $0x460] sm:$0xff]
    %v1645 = vld [vmem:[#allocation18 + $0x468] sm:$0xff]
    %v1646 = vld [vmem:[#allocation18 + $0x470] sm:$0xff]
    %v1647 = vld [vmem:[#allocation18 + $0x478] sm:$0xff]
    %v1648 = vld [vmem:[#allocation18 + $0x480] sm:$0xff]
    %v1649 = vld [vmem:[#allocation18 + $0x488] sm:$0xff]
    %v1650 = vld [vmem:[#allocation18 + $0x490] sm:$0xff]
    %v1651 = vld [vmem:[#allocation18 + $0x498] sm:$0xff]
    %v1652 = vld [vmem:[#allocation18 + $0x4a0] sm:$0xff]
    %v1653 = vld [vmem:[#allocation18 + $0x4a8] sm:$0xff]
    %v1654 = vld [vmem:[#allocation18 + $0x4b0] sm:$0xff]
    %v1655 = vld [vmem:[#allocation18 + $0x4b8] sm:$0xff]
    %v1656 = vld [vmem:[#allocation18 + $0x4c0] sm:$0xff]
    %v1657 = vld [vmem:[#allocation18 + $0x4c8] sm:$0xff]
    %v1658 = vld [vmem:[#allocation18 + $0x4d0] sm:$0xff]
    %v1659 = vld [vmem:[#allocation18 + $0x4d8] sm:$0xff]
    %v1660 = vld [vmem:[#allocation18 + $0x4e0] sm:$0xff]
    %v1661 = vld [vmem:[#allocation18 + $0x4e8] sm:$0xff]
    %v1662 = vld [vmem:[#allocation18 + $0x4f0] sm:$0xff]
    %v1663 = vld [vmem:[#allocation18 + $0x4f8] sm:$0xff]
    %v1664 = vld [vmem:[#allocation18 + $0x500] sm:$0xff]
    %v1665 = vld [vmem:[#allocation18 + $0x508] sm:$0xff]
    %v1666 = vld [vmem:[#allocation18 + $0x510] sm:$0xff]
    %v1667 = vld [vmem:[#allocation18 + $0x518] sm:$0xff]
    %v1668 = vld [vmem:[#allocation18 + $0x520] sm:$0xff]
    %v1669 = vld [vmem:[#allocation18 + $0x528] sm:$0xff]
    %v1670 = vld [vmem:[#allocation18 + $0x530] sm:$0xff]
    %v1671 = vld [vmem:[#allocation18 + $0x538] sm:$0xff]
    %v1672 = vld [vmem:[#allocation18 + $0x540] sm:$0xff]
    %v1673 = vld [vmem:[#allocation18 + $0x548] sm:$0xff]
    %v1674 = vld [vmem:[#allocation18 + $0x550] sm:$0xff]
    %v1675 = vld [vmem:[#allocation18 + $0x558] sm:$0xff]
    %v1676 = vld [vmem:[#allocation18 + $0x560] sm:$0xff]
    %v1677 = vld [vmem:[#allocation18 + $0x568] sm:$0xff]
    %v1678 = vld [vmem:[#allocation18 + $0x570] sm:$0xff]
    %v1679 = vld [vmem:[#allocation18 + $0x578] sm:$0xff]
    %v1680 = vld [vmem:[#allocation18 + $0x580] sm:$0xff]
    %v1681 = vld [vmem:[#allocation18 + $0x588] sm:$0xff]
    %v1682 = vld [vmem:[#allocation18 + $0x590] sm:$0xff]
    %v1683 = vld [vmem:[#allocation18 + $0x598] sm:$0xff]
    %v1684 = vld [vmem:[#allocation18 + $0x5a0] sm:$0xff]
    %v1685 = vld [vmem:[#allocation18 + $0x5a8] sm:$0xff]
    %v1686 = vld [vmem:[#allocation18 + $0x5b0] sm:$0xff]
    %v1687 = vld [vmem:[#allocation18 + $0x5b8] sm:$0xff]
    %v1688 = vld [vmem:[#allocation18 + $0x5c0] sm:$0xff]
    %v1689 = vld [vmem:[#allocation18 + $0x5c8] sm:$0xff]
    %v1690 = vld [vmem:[#allocation18 + $0x5d0] sm:$0xff]
    %v1691 = vld [vmem:[#allocation18 + $0x5d8] sm:$0xff]
    %v1692 = vld [vmem:[#allocation18 + $0x5e0] sm:$0xff]
    %v1693 = vld [vmem:[#allocation18 + $0x5e8] sm:$0xff]
    %v1694 = vld [vmem:[#allocation18 + $0x5f0] sm:$0xff]
    %v1695 = vld [vmem:[#allocation18 + $0x5f8] sm:$0xff]
    %v1696 = vld [vmem:[#allocation18 + $0x600] sm:$0xff]
    %v1697 = vld [vmem:[#allocation18 + $0x608] sm:$0xff]
    %v1698 = vld [vmem:[#allocation18 + $0x610] sm:$0xff]
    %v1699 = vld [vmem:[#allocation18 + $0x618] sm:$0xff]
    %v1700 = vld [vmem:[#allocation18 + $0x620] sm:$0xff]
    %v1701 = vld [vmem:[#allocation18 + $0x628] sm:$0xff]
    %v1702 = vld [vmem:[#allocation18 + $0x630] sm:$0xff]
    %v1703 = vld [vmem:[#allocation18 + $0x638] sm:$0xff]
    %v1704 = vld [vmem:[#allocation18 + $0x640] sm:$0xff]
    %v1705 = vld [vmem:[#allocation18 + $0x648] sm:$0xff]
    %v1706 = vld [vmem:[#allocation18 + $0x650] sm:$0xff]
    %v1707 = vld [vmem:[#allocation18 + $0x658] sm:$0xff]
    %v1708 = vld [vmem:[#allocation18 + $0x660] sm:$0xff]
    %v1709 = vld [vmem:[#allocation18 + $0x668] sm:$0xff]
    %v1710 = vld [vmem:[#allocation18 + $0x670] sm:$0xff]
    %v1711 = vld [vmem:[#allocation18 + $0x678] sm:$0xff]
    %v1712 = vld [vmem:[#allocation18 + $0x680] sm:$0xff]
    %v1713 = vld [vmem:[#allocation18 + $0x688] sm:$0xff]
    %v1714 = vld [vmem:[#allocation18 + $0x690] sm:$0xff]
    %v1715 = vld [vmem:[#allocation18 + $0x698] sm:$0xff]
    %v1716 = vld [vmem:[#allocation18 + $0x6a0] sm:$0xff]
    %v1717 = vld [vmem:[#allocation18 + $0x6a8] sm:$0xff]
    %v1718 = vld [vmem:[#allocation18 + $0x6b0] sm:$0xff]
    %v1719 = vld [vmem:[#allocation18 + $0x6b8] sm:$0xff]
    %v1720 = vld [vmem:[#allocation18 + $0x6c0] sm:$0xff]
    %v1721 = vld [vmem:[#allocation18 + $0x6c8] sm:$0xff]
    %v1722 = vld [vmem:[#allocation18 + $0x6d0] sm:$0xff]
    %v1723 = vld [vmem:[#allocation18 + $0x6d8] sm:$0xff]
    %v1724 = vld [vmem:[#allocation18 + $0x6e0] sm:$0xff]
    %v1725 = vld [vmem:[#allocation18 + $0x6e8] sm:$0xff]
    %v1726 = vld [vmem:[#allocation18 + $0x6f0] sm:$0xff]
    %v1727 = vld [vmem:[#allocation18 + $0x6f8] sm:$0xff]
    %v1728 = vld [vmem:[#allocation18 + $0x700] sm:$0xff]
    %v1729 = vld [vmem:[#allocation18 + $0x708] sm:$0xff]
    %v1730 = vld [vmem:[#allocation18 + $0x710] sm:$0xff]
    %v1731 = vld [vmem:[#allocation18 + $0x718] sm:$0xff]
    %v1732 = vld [vmem:[#allocation18 + $0x720] sm:$0xff]
    %v1733 = vld [vmem:[#allocation18 + $0x728] sm:$0xff]
    %v1734 = vld [vmem:[#allocation18 + $0x730] sm:$0xff]
    %v1735 = vld [vmem:[#allocation18 + $0x738] sm:$0xff]
    %v1736 = vld [vmem:[#allocation18 + $0x740] sm:$0xff]
    %v1737 = vld [vmem:[#allocation18 + $0x748] sm:$0xff]
    %v1738 = vld [vmem:[#allocation18 + $0x750] sm:$0xff]
    %v1739 = vld [vmem:[#allocation18 + $0x758] sm:$0xff]
    %v1740 = vld [vmem:[#allocation18 + $0x760] sm:$0xff]
    %v1741 = vld [vmem:[#allocation18 + $0x768] sm:$0xff]
    %v1742 = vld [vmem:[#allocation18 + $0x770] sm:$0xff]
    %v1743 = vld [vmem:[#allocation18 + $0x778] sm:$0xff]
    %v1744 = vld [vmem:[#allocation18 + $0x780] sm:$0xff]
    %v1745 = vld [vmem:[#allocation18 + $0x788] sm:$0xff]
    %v1746 = vld [vmem:[#allocation18 + $0x790] sm:$0xff]
    %v1747 = vld [vmem:[#allocation18 + $0x798] sm:$0xff]
    %v1748 = vld [vmem:[#allocation18 + $0x7a0] sm:$0xff]
    %v1749 = vld [vmem:[#allocation18 + $0x7a8] sm:$0xff]
    %v1750 = vld [vmem:[#allocation18 + $0x7b0] sm:$0xff]
    %v1751 = vld [vmem:[#allocation18 + $0x7b8] sm:$0xff]
    %v1752 = vld [vmem:[#allocation18 + $0x7c0] sm:$0xff]
    %v1753 = vld [vmem:[#allocation18 + $0x7c8] sm:$0xff]
    %v1754 = vld [vmem:[#allocation18 + $0x7d0] sm:$0xff]
    %v1755 = vld [vmem:[#allocation18 + $0x7d8] sm:$0xff]
    %v1756 = vld [vmem:[#allocation18 + $0x7e0] sm:$0xff]
    %v1757 = vld [vmem:[#allocation18 + $0x7e8] sm:$0xff]
    %v1758 = vld [vmem:[#allocation18 + $0x7f0] sm:$0xff]
    %v1759 = vld [vmem:[#allocation18 + $0x7f8] sm:$0xff]
    %v1760 = vld [vmem:[#allocation18 + $0x800] sm:$0xff]
    %v1761 = vld [vmem:[#allocation18 + $0x808] sm:$0xff]
    %v1762 = vld [vmem:[#allocation18 + $0x810] sm:$0xff]
    %v1763 = vld [vmem:[#allocation18 + $0x818] sm:$0xff]
    %v1764 = vld [vmem:[#allocation18 + $0x820] sm:$0xff]
    %v1765 = vld [vmem:[#allocation18 + $0x828] sm:$0xff]
    %v1766 = vld [vmem:[#allocation18 + $0x830] sm:$0xff]
    %v1767 = vld [vmem:[#allocation18 + $0x838] sm:$0xff]
    %v1768 = vld [vmem:[#allocation18 + $0x840] sm:$0xff]
    %v1769 = vld [vmem:[#allocation18 + $0x848] sm:$0xff]
    %v1770 = vld [vmem:[#allocation18 + $0x850] sm:$0xff]
    %v1771 = vld [vmem:[#allocation18 + $0x858] sm:$0xff]
    %v1772 = vld [vmem:[#allocation18 + $0x860] sm:$0xff]
    %v1773 = vld [vmem:[#allocation18 + $0x868] sm:$0xff]
    %v1774 = vld [vmem:[#allocation18 + $0x870] sm:$0xff]
    %v1775 = vld [vmem:[#allocation18 + $0x878] sm:$0xff]
    %v1776 = vld [vmem:[#allocation18 + $0x880] sm:$0xff]
    %v1777 = vld [vmem:[#allocation18 + $0x888] sm:$0xff]
    %v1778 = vld [vmem:[#allocation18 + $0x890] sm:$0xff]
    %v1779 = vld [vmem:[#allocation18 + $0x898] sm:$0xff]
    %v1780 = vld [vmem:[#allocation18 + $0x8a0] sm:$0xff]
    %v1781 = vld [vmem:[#allocation18 + $0x8a8] sm:$0xff]
    %v1782 = vld [vmem:[#allocation18 + $0x8b0] sm:$0xff]
    %v1783 = vld [vmem:[#allocation18 + $0x8b8] sm:$0xff]
    %v1784 = vld [vmem:[#allocation18 + $0x8c0] sm:$0xff]
    %v1785 = vld [vmem:[#allocation18 + $0x8c8] sm:$0xff]
    %v1786 = vld [vmem:[#allocation18 + $0x8d0] sm:$0xff]
    %v1787 = vld [vmem:[#allocation18 + $0x8d8] sm:$0xff]
    %v1788 = vld [vmem:[#allocation18 + $0x8e0] sm:$0xff]
    %v1789 = vld [vmem:[#allocation18 + $0x8e8] sm:$0xff]
    %v1790 = vld [vmem:[#allocation18 + $0x8f0] sm:$0xff]
    %v1791 = vld [vmem:[#allocation18 + $0x8f8] sm:$0xff]
    %v1792 = vld [vmem:[#allocation18 + $0x900] sm:$0xff]
    %v1793 = vld [vmem:[#allocation18 + $0x908] sm:$0xff]
    %v1794 = vld [vmem:[#allocation18 + $0x910] sm:$0xff]
    %v1795 = vld [vmem:[#allocation18 + $0x918] sm:$0xff]
    %v1796 = vld [vmem:[#allocation18 + $0x920] sm:$0xff]
    %v1797 = vld [vmem:[#allocation18 + $0x928] sm:$0xff]
    %v1798 = vld [vmem:[#allocation18 + $0x930] sm:$0xff]
    %v1799 = vld [vmem:[#allocation18 + $0x938] sm:$0xff]
    %v1800 = vld [vmem:[#allocation18 + $0x940] sm:$0xff]
    %v1801 = vld [vmem:[#allocation18 + $0x948] sm:$0xff]
    %v1802 = vld [vmem:[#allocation18 + $0x950] sm:$0xff]
    %v1803 = vld [vmem:[#allocation18 + $0x958] sm:$0xff]
    %v1804 = vld [vmem:[#allocation18 + $0x960] sm:$0xff]
    %v1805 = vld [vmem:[#allocation18 + $0x968] sm:$0xff]
    %v1806 = vld [vmem:[#allocation18 + $0x970] sm:$0xff]
    %v1807 = vld [vmem:[#allocation18 + $0x978] sm:$0xff]
    %v1808 = vld [vmem:[#allocation18 + $0x980] sm:$0xff]
    %v1809 = vld [vmem:[#allocation18 + $0x988] sm:$0xff]
    %v1810 = vld [vmem:[#allocation18 + $0x990] sm:$0xff]
    %v1811 = vld [vmem:[#allocation18 + $0x998] sm:$0xff]
    %v1812 = vld [vmem:[#allocation18 + $0x9a0] sm:$0xff]
    %v1813 = vld [vmem:[#allocation18 + $0x9a8] sm:$0xff]
    %v1814 = vld [vmem:[#allocation18 + $0x9b0] sm:$0xff]
    %v1815 = vld [vmem:[#allocation18 + $0x9b8] sm:$0xff]
    %v1816 = vld [vmem:[#allocation18 + $0x9c0] sm:$0xff]
    %v1817 = vld [vmem:[#allocation18 + $0x9c8] sm:$0xff]
    %v1818 = vld [vmem:[#allocation18 + $0x9d0] sm:$0xff]
    %v1819 = vld [vmem:[#allocation18 + $0x9d8] sm:$0xff]
    %v1820 = vld [vmem:[#allocation18 + $0x9e0] sm:$0xff]
    %v1821 = vld [vmem:[#allocation18 + $0x9e8] sm:$0xff]
    %v1822 = vld [vmem:[#allocation18 + $0x9f0] sm:$0xff]
    %v1823 = vld [vmem:[#allocation18 + $0x9f8] sm:$0xff]
    %v1824 = vld [vmem:[#allocation18 + $0xa00] sm:$0xff]
    %v1825 = vld [vmem:[#allocation18 + $0xa08] sm:$0xff]
    %v1826 = vld [vmem:[#allocation18 + $0xa10] sm:$0xff]
    %v1827 = vld [vmem:[#allocation18 + $0xa18] sm:$0xff]
    %v1828 = vld [vmem:[#allocation18 + $0xa20] sm:$0xff]
    %v1829 = vld [vmem:[#allocation18 + $0xa28] sm:$0xff]
    %v1830 = vld [vmem:[#allocation18 + $0xa30] sm:$0xff]
    %v1831 = vld [vmem:[#allocation18 + $0xa38] sm:$0xff]
    %v1832 = vld [vmem:[#allocation18 + $0xa40] sm:$0xff]
    %v1833 = vld [vmem:[#allocation18 + $0xa48] sm:$0xff]
    %v1834 = vld [vmem:[#allocation18 + $0xa50] sm:$0xff]
    %v1835 = vld [vmem:[#allocation18 + $0xa58] sm:$0xff]
    %v1836 = vld [vmem:[#allocation18 + $0xa60] sm:$0xff]
    %v1837 = vld [vmem:[#allocation18 + $0xa68] sm:$0xff]
    %v1838 = vld [vmem:[#allocation18 + $0xa70] sm:$0xff]
    %v1839 = vld [vmem:[#allocation18 + $0xa78] sm:$0xff]
    %v1840 = vld [vmem:[#allocation18 + $0xa80] sm:$0xff]
    %v1841 = vld [vmem:[#allocation18 + $0xa88] sm:$0xff]
    %v1842 = vld [vmem:[#allocation18 + $0xa90] sm:$0xff]
    %v1843 = vld [vmem:[#allocation18 + $0xa98] sm:$0xff]
    %v1844 = vld [vmem:[#allocation18 + $0xaa0] sm:$0xff]
    %v1845 = vld [vmem:[#allocation18 + $0xaa8] sm:$0xff]
    %v1846 = vld [vmem:[#allocation18 + $0xab0] sm:$0xff]
    %v1847 = vld [vmem:[#allocation18 + $0xab8] sm:$0xff]
    %v1848 = vld [vmem:[#allocation18 + $0xac0] sm:$0xff]
    %v1849 = vld [vmem:[#allocation18 + $0xac8] sm:$0xff]
    %v1850 = vld [vmem:[#allocation18 + $0xad0] sm:$0xff]
    %v1851 = vld [vmem:[#allocation18 + $0xad8] sm:$0xff]
    %v1852 = vld [vmem:[#allocation18 + $0xae0] sm:$0xff]
    %v1853 = vld [vmem:[#allocation18 + $0xae8] sm:$0xff]
    %v1854 = vld [vmem:[#allocation18 + $0xaf0] sm:$0xff]
    %v1855 = vld [vmem:[#allocation18 + $0xaf8] sm:$0xff]
    %v1856 = vld [vmem:[#allocation18 + $0xb00] sm:$0xff]
    %v1857 = vld [vmem:[#allocation18 + $0xb08] sm:$0xff]
    %v1858 = vld [vmem:[#allocation18 + $0xb10] sm:$0xff]
    %v1859 = vld [vmem:[#allocation18 + $0xb18] sm:$0xff]
    %v1860 = vld [vmem:[#allocation18 + $0xb20] sm:$0xff]
    %v1861 = vld [vmem:[#allocation18 + $0xb28] sm:$0xff]
    %v1862 = vld [vmem:[#allocation18 + $0xb30] sm:$0xff]
    %v1863 = vld [vmem:[#allocation18 + $0xb38] sm:$0xff]
    %v1864 = vld [vmem:[#allocation18 + $0xb40] sm:$0xff]
    %v1865 = vld [vmem:[#allocation18 + $0xb48] sm:$0xff]
    %v1866 = vld [vmem:[#allocation18 + $0xb50] sm:$0xff]
    %v1867 = vld [vmem:[#allocation18 + $0xb58] sm:$0xff]
    %v1868 = vld [vmem:[#allocation18 + $0xb60] sm:$0xff]
    %v1869 = vld [vmem:[#allocation18 + $0xb68] sm:$0xff]
    %v1870 = vld [vmem:[#allocation18 + $0xb70] sm:$0xff]
    %v1871 = vld [vmem:[#allocation18 + $0xb78] sm:$0xff]
    %v1872 = vld [vmem:[#allocation18 + $0xb80] sm:$0xff]
    %v1873 = vld [vmem:[#allocation18 + $0xb88] sm:$0xff]
    %v1874 = vld [vmem:[#allocation18 + $0xb90] sm:$0xff]
    %v1875 = vld [vmem:[#allocation18 + $0xb98] sm:$0xff]
    %v1876 = vld [vmem:[#allocation18 + $0xba0] sm:$0xff]
    %v1877 = vld [vmem:[#allocation18 + $0xba8] sm:$0xff]
    %v1878 = vld [vmem:[#allocation18 + $0xbb0] sm:$0xff]
    %v1879 = vld [vmem:[#allocation18 + $0xbb8] sm:$0xff]
    %v1880 = vld [vmem:[#allocation18 + $0xbc0] sm:$0xff]
    %v1881 = vld [vmem:[#allocation18 + $0xbc8] sm:$0xff]
    %v1882 = vld [vmem:[#allocation18 + $0xbd0] sm:$0xff]
    %v1883 = vld [vmem:[#allocation18 + $0xbd8] sm:$0xff]
    %v1884 = vld [vmem:[#allocation18 + $0xbe0] sm:$0xff]
    %v1885 = vld [vmem:[#allocation18 + $0xbe8] sm:$0xff]
    %v1886 = vld [vmem:[#allocation18 + $0xbf0] sm:$0xff]
    %v1887 = vld [vmem:[#allocation18 + $0xbf8] sm:$0xff]
    %v1888 = vld [vmem:[#allocation19] sm:$0x3f]
    %v1890 = vperm.slane %v1888, 0
    %v1891 = vperm.slane %v1888, 1
    %v1892 = vperm.slane %v1888, 2
    %v1893 = vperm.slane %v1888, 3
    %v1894 = vperm.slane %v1888, 4
    %v1895 = vperm.slane %v1888, 5
    %1902 = vmatpush.msra.mxu0 %v1594
    %1903 = vmatpush.msra.mxu0 %v1588
    %1904 = vmatpush.msra.mxu0 %v1582
    %1905 = vmatpush.msra.mxu0 %v1576
    %1906 = vmatpush.msra.mxu0 %v1570
    %1907 = vmatpush.msra.mxu0 %v1564
    %1908 = vmatpush.msra.mxu0 %v1558
    %1909 = vmatpush.msra.mxu0 %v1552
    %1910 = vmatpush.msra.mxu0 %v1546
    %1911 = vmatpush.msra.mxu0 %v1540
    %1912 = vmatpush.msra.mxu0 %v1534
    %1913 = vmatpush.msra.mxu0 %v1528
    %1914 = vmatpush.msra.mxu0 %v1522
    %1915 = vmatpush.msra.mxu0 %v1516
    %1916 = vmatpush.msra.mxu0 %v1510
    %1917 = vmatpush.msra.mxu0 %v1504
    %1918 = vmatmul.f32.gmra.mxu0 %v1500
    %v1919 = vpop.f32.mrf.mxu0
    %v1920 = vadd.f32 %v1890, %v1919
    %1921 = vdwg.mxu0
    %1922 = vmatpush.msra.mxu0 %v1690
    %1923 = vmatpush.msra.mxu0 %v1684
    %1924 = vmatpush.msra.mxu0 %v1678
    %1925 = vmatpush.msra.mxu0 %v1672
    %1926 = vmatpush.msra.mxu0 %v1666
    %1927 = vmatpush.msra.mxu0 %v1660
    %1928 = vmatpush.msra.mxu0 %v1654
    %1929 = vmatpush.msra.mxu0 %v1648
    %1930 = vmatpush.msra.mxu0 %v1642
    %1931 = vmatpush.msra.mxu0 %v1636
    %1932 = vmatpush.msra.mxu0 %v1630
    %1933 = vmatpush.msra.mxu0 %v1624
    %1934 = vmatpush.msra.mxu0 %v1618
    %1935 = vmatpush.msra.mxu0 %v1612
    %1936 = vmatpush.msra.mxu0 %v1606
    %1937 = vmatpush.msra.mxu0 %v1600
    %1938 = vmatmul.f32.gmra.mxu0 %v1501
    %v1939 = vpop.f32.mrf.mxu0
    %v1940 = vadd.f32 %v1920, %v1939
    %1941 = vdwg.mxu0
    %1942 = vmatpush.msra.mxu0 %v1786
    %1943 = vmatpush.msra.mxu0 %v1780
    %1944 = vmatpush.msra.mxu0 %v1774
    %1945 = vmatpush.msra.mxu0 %v1768
    %1946 = vmatpush.msra.mxu0 %v1762
    %1947 = vmatpush.msra.mxu0 %v1756
    %1948 = vmatpush.msra.mxu0 %v1750
    %1949 = vmatpush.msra.mxu0 %v1744
    %1950 = vmatpush.msra.mxu0 %v1738
    %1951 = vmatpush.msra.mxu0 %v1732
    %1952 = vmatpush.msra.mxu0 %v1726
    %1953 = vmatpush.msra.mxu0 %v1720
    %1954 = vmatpush.msra.mxu0 %v1714
    %1955 = vmatpush.msra.mxu0 %v1708
    %1956 = vmatpush.msra.mxu0 %v1702
    %1957 = vmatpush.msra.mxu0 %v1696
    %1958 = vmatmul.f32.gmra.mxu0 %v1502
    %v1959 = vpop.f32.mrf.mxu0
    %v1960 = vadd.f32 %v1940, %v1959
    %1961 = vdwg.mxu0
    %1962 = vmatpush.msra.mxu0 %v1882
    %1963 = vmatpush.msra.mxu0 %v1876
    %1964 = vmatpush.msra.mxu0 %v1870
    %1965 = vmatpush.msra.mxu0 %v1864
    %1966 = vmatpush.msra.mxu0 %v1858
    %1967 = vmatpush.msra.mxu0 %v1852
    %1968 = vmatpush.msra.mxu0 %v1846
    %1969 = vmatpush.msra.mxu0 %v1840
    %1970 = vmatpush.msra.mxu0 %v1834
    %1971 = vmatpush.msra.mxu0 %v1828
    %1972 = vmatpush.msra.mxu0 %v1822
    %1973 = vmatpush.msra.mxu0 %v1816
    %1974 = vmatpush.msra.mxu0 %v1810
    %1975 = vmatpush.msra.mxu0 %v1804
    %1976 = vmatpush.msra.mxu0 %v1798
    %1977 = vmatpush.msra.mxu0 %v1792
    %1978 = vmatmul.f32.gmra.mxu0 %v1503
    %v1979 = vpop.f32.mrf.mxu0
    %v1980 = vadd.f32 %v1960, %v1979
    %1981 = vdwg.mxu0
    %1982 = vmatpush.msra.mxu0 %v1595
    %1983 = vmatpush.msra.mxu0 %v1589
    %1984 = vmatpush.msra.mxu0 %v1583
    %1985 = vmatpush.msra.mxu0 %v1577
    %1986 = vmatpush.msra.mxu0 %v1571
    %1987 = vmatpush.msra.mxu0 %v1565
    %1988 = vmatpush.msra.mxu0 %v1559
    %1989 = vmatpush.msra.mxu0 %v1553
    %1990 = vmatpush.msra.mxu0 %v1547
    %1991 = vmatpush.msra.mxu0 %v1541
    %1992 = vmatpush.msra.mxu0 %v1535
    %1993 = vmatpush.msra.mxu0 %v1529
    %1994 = vmatpush.msra.mxu0 %v1523
    %1995 = vmatpush.msra.mxu0 %v1517
    %1996 = vmatpush.msra.mxu0 %v1511
    %1997 = vmatpush.msra.mxu0 %v1505
    %1998 = vmatmul.f32.gmra.mxu0 %v1500
    %v1999 = vpop.f32.mrf.mxu0
    %v2000 = vadd.f32 %v1891, %v1999
    %2001 = vdwg.mxu0
    %2002 = vmatpush.msra.mxu0 %v1691
    %2003 = vmatpush.msra.mxu0 %v1685
    %2004 = vmatpush.msra.mxu0 %v1679
    %2005 = vmatpush.msra.mxu0 %v1673
    %2006 = vmatpush.msra.mxu0 %v1667
    %2007 = vmatpush.msra.mxu0 %v1661
    %2008 = vmatpush.msra.mxu0 %v1655
    %2009 = vmatpush.msra.mxu0 %v1649
    %2010 = vmatpush.msra.mxu0 %v1643
    %2011 = vmatpush.msra.mxu0 %v1637
    %2012 = vmatpush.msra.mxu0 %v1631
    %2013 = vmatpush.msra.mxu0 %v1625
    %2014 = vmatpush.msra.mxu0 %v1619
    %2015 = vmatpush.msra.mxu0 %v1613
    %2016 = vmatpush.msra.mxu0 %v1607
    %2017 = vmatpush.msra.mxu0 %v1601
    %2018 = vmatmul.f32.gmra.mxu0 %v1501
    %v2019 = vpop.f32.mrf.mxu0
    %v2020 = vadd.f32 %v2000, %v2019
    %2021 = vdwg.mxu0
    %2022 = vmatpush.msra.mxu0 %v1787
    %2023 = vmatpush.msra.mxu0 %v1781
    %2024 = vmatpush.msra.mxu0 %v1775
    %2025 = vmatpush.msra.mxu0 %v1769
    %2026 = vmatpush.msra.mxu0 %v1763
    %2027 = vmatpush.msra.mxu0 %v1757
    %2028 = vmatpush.msra.mxu0 %v1751
    %2029 = vmatpush.msra.mxu0 %v1745
    %2030 = vmatpush.msra.mxu0 %v1739
    %2031 = vmatpush.msra.mxu0 %v1733
    %2032 = vmatpush.msra.mxu0 %v1727
    %2033 = vmatpush.msra.mxu0 %v1721
    %2034 = vmatpush.msra.mxu0 %v1715
    %2035 = vmatpush.msra.mxu0 %v1709
    %2036 = vmatpush.msra.mxu0 %v1703
    %2037 = vmatpush.msra.mxu0 %v1697
    %2038 = vmatmul.f32.gmra.mxu0 %v1502
    %v2039 = vpop.f32.mrf.mxu0
    %v2040 = vadd.f32 %v2020, %v2039
    %2041 = vdwg.mxu0
    %2042 = vmatpush.msra.mxu0 %v1883
    %2043 = vmatpush.msra.mxu0 %v1877
    %2044 = vmatpush.msra.mxu0 %v1871
    %2045 = vmatpush.msra.mxu0 %v1865
    %2046 = vmatpush.msra.mxu0 %v1859
    %2047 = vmatpush.msra.mxu0 %v1853
    %2048 = vmatpush.msra.mxu0 %v1847
    %2049 = vmatpush.msra.mxu0 %v1841
    %2050 = vmatpush.msra.mxu0 %v1835
    %2051 = vmatpush.msra.mxu0 %v1829
    %2052 = vmatpush.msra.mxu0 %v1823
    %2053 = vmatpush.msra.mxu0 %v1817
    %2054 = vmatpush.msra.mxu0 %v1811
    %2055 = vmatpush.msra.mxu0 %v1805
    %2056 = vmatpush.msra.mxu0 %v1799
    %2057 = vmatpush.msra.mxu0 %v1793
    %2058 = vmatmul.f32.gmra.mxu0 %v1503
    %v2059 = vpop.f32.mrf.mxu0
    %v2060 = vadd.f32 %v2040, %v2059
    %2061 = vdwg.mxu0
    %2062 = vmatpush.msra.mxu0 %v1596
    %2063 = vmatpush.msra.mxu0 %v1590
    %2064 = vmatpush.msra.mxu0 %v1584
    %2065 = vmatpush.msra.mxu0 %v1578
    %2066 = vmatpush.msra.mxu0 %v1572
    %2067 = vmatpush.msra.mxu0 %v1566
    %2068 = vmatpush.msra.mxu0 %v1560
    %2069 = vmatpush.msra.mxu0 %v1554
    %2070 = vmatpush.msra.mxu0 %v1548
    %2071 = vmatpush.msra.mxu0 %v1542
    %2072 = vmatpush.msra.mxu0 %v1536
    %2073 = vmatpush.msra.mxu0 %v1530
    %2074 = vmatpush.msra.mxu0 %v1524
    %2075 = vmatpush.msra.mxu0 %v1518
    %2076 = vmatpush.msra.mxu0 %v1512
    %2077 = vmatpush.msra.mxu0 %v1506
    %2078 = vmatmul.f32.gmra.mxu0 %v1500
    %v2079 = vpop.f32.mrf.mxu0
    %v2080 = vadd.f32 %v1892, %v2079
    %2081 = vdwg.mxu0
    %2082 = vmatpush.msra.mxu0 %v1692
    %2083 = vmatpush.msra.mxu0 %v1686
    %2084 = vmatpush.msra.mxu0 %v1680
    %2085 = vmatpush.msra.mxu0 %v1674
    %2086 = vmatpush.msra.mxu0 %v1668
    %2087 = vmatpush.msra.mxu0 %v1662
    %2088 = vmatpush.msra.mxu0 %v1656
    %2089 = vmatpush.msra.mxu0 %v1650
    %2090 = vmatpush.msra.mxu0 %v1644
    %2091 = vmatpush.msra.mxu0 %v1638
    %2092 = vmatpush.msra.mxu0 %v1632
    %2093 = vmatpush.msra.mxu0 %v1626
    %2094 = vmatpush.msra.mxu0 %v1620
    %2095 = vmatpush.msra.mxu0 %v1614
    %2096 = vmatpush.msra.mxu0 %v1608
    %2097 = vmatpush.msra.mxu0 %v1602
    %2098 = vmatmul.f32.gmra.mxu0 %v1501
    %v2099 = vpop.f32.mrf.mxu0
    %v2100 = vadd.f32 %v2080, %v2099
    %2101 = vdwg.mxu0
    %2102 = vmatpush.msra.mxu0 %v1788
    %2103 = vmatpush.msra.mxu0 %v1782
    %2104 = vmatpush.msra.mxu0 %v1776
    %2105 = vmatpush.msra.mxu0 %v1770
    %2106 = vmatpush.msra.mxu0 %v1764
    %2107 = vmatpush.msra.mxu0 %v1758
    %2108 = vmatpush.msra.mxu0 %v1752
    %2109 = vmatpush.msra.mxu0 %v1746
    %2110 = vmatpush.msra.mxu0 %v1740
    %2111 = vmatpush.msra.mxu0 %v1734
    %2112 = vmatpush.msra.mxu0 %v1728
    %2113 = vmatpush.msra.mxu0 %v1722
    %2114 = vmatpush.msra.mxu0 %v1716
    %2115 = vmatpush.msra.mxu0 %v1710
    %2116 = vmatpush.msra.mxu0 %v1704
    %2117 = vmatpush.msra.mxu0 %v1698
    %2118 = vmatmul.f32.gmra.mxu0 %v1502
    %v2119 = vpop.f32.mrf.mxu0
    %v2120 = vadd.f32 %v2100, %v2119
    %2121 = vdwg.mxu0
    %2122 = vmatpush.msra.mxu0 %v1884
    %2123 = vmatpush.msra.mxu0 %v1878
    %2124 = vmatpush.msra.mxu0 %v1872
    %2125 = vmatpush.msra.mxu0 %v1866
    %2126 = vmatpush.msra.mxu0 %v1860
    %2127 = vmatpush.msra.mxu0 %v1854
    %2128 = vmatpush.msra.mxu0 %v1848
    %2129 = vmatpush.msra.mxu0 %v1842
    %2130 = vmatpush.msra.mxu0 %v1836
    %2131 = vmatpush.msra.mxu0 %v1830
    %2132 = vmatpush.msra.mxu0 %v1824
    %2133 = vmatpush.msra.mxu0 %v1818
    %2134 = vmatpush.msra.mxu0 %v1812
    %2135 = vmatpush.msra.mxu0 %v1806
    %2136 = vmatpush.msra.mxu0 %v1800
    %2137 = vmatpush.msra.mxu0 %v1794
    %2138 = vmatmul.f32.gmra.mxu0 %v1503
    %v2139 = vpop.f32.mrf.mxu0
    %v2140 = vadd.f32 %v2120, %v2139
    %2141 = vdwg.mxu0
    %2142 = vmatpush.msra.mxu0 %v1597
    %2143 = vmatpush.msra.mxu0 %v1591
    %2144 = vmatpush.msra.mxu0 %v1585
    %2145 = vmatpush.msra.mxu0 %v1579
    %2146 = vmatpush.msra.mxu0 %v1573
    %2147 = vmatpush.msra.mxu0 %v1567
    %2148 = vmatpush.msra.mxu0 %v1561
    %2149 = vmatpush.msra.mxu0 %v1555
    %2150 = vmatpush.msra.mxu0 %v1549
    %2151 = vmatpush.msra.mxu0 %v1543
    %2152 = vmatpush.msra.mxu0 %v1537
    %2153 = vmatpush.msra.mxu0 %v1531
    %2154 = vmatpush.msra.mxu0 %v1525
    %2155 = vmatpush.msra.mxu0 %v1519
    %2156 = vmatpush.msra.mxu0 %v1513
    %2157 = vmatpush.msra.mxu0 %v1507
    %2158 = vmatmul.f32.gmra.mxu0 %v1500
    %v2159 = vpop.f32.mrf.mxu0
    %v2160 = vadd.f32 %v1893, %v2159
    %2161 = vdwg.mxu0
    %2162 = vmatpush.msra.mxu0 %v1693
    %2163 = vmatpush.msra.mxu0 %v1687
    %2164 = vmatpush.msra.mxu0 %v1681
    %2165 = vmatpush.msra.mxu0 %v1675
    %2166 = vmatpush.msra.mxu0 %v1669
    %2167 = vmatpush.msra.mxu0 %v1663
    %2168 = vmatpush.msra.mxu0 %v1657
    %2169 = vmatpush.msra.mxu0 %v1651
    %2170 = vmatpush.msra.mxu0 %v1645
    %2171 = vmatpush.msra.mxu0 %v1639
    %2172 = vmatpush.msra.mxu0 %v1633
    %2173 = vmatpush.msra.mxu0 %v1627
    %2174 = vmatpush.msra.mxu0 %v1621
    %2175 = vmatpush.msra.mxu0 %v1615
    %2176 = vmatpush.msra.mxu0 %v1609
    %2177 = vmatpush.msra.mxu0 %v1603
    %2178 = vmatmul.f32.gmra.mxu0 %v1501
    %v2179 = vpop.f32.mrf.mxu0
    %v2180 = vadd.f32 %v2160, %v2179
    %2181 = vdwg.mxu0
    %2182 = vmatpush.msra.mxu0 %v1789
    %2183 = vmatpush.msra.mxu0 %v1783
    %2184 = vmatpush.msra.mxu0 %v1777
    %2185 = vmatpush.msra.mxu0 %v1771
    %2186 = vmatpush.msra.mxu0 %v1765
    %2187 = vmatpush.msra.mxu0 %v1759
    %2188 = vmatpush.msra.mxu0 %v1753
    %2189 = vmatpush.msra.mxu0 %v1747
    %2190 = vmatpush.msra.mxu0 %v1741
    %2191 = vmatpush.msra.mxu0 %v1735
    %2192 = vmatpush.msra.mxu0 %v1729
    %2193 = vmatpush.msra.mxu0 %v1723
    %2194 = vmatpush.msra.mxu0 %v1717
    %2195 = vmatpush.msra.mxu0 %v1711
    %2196 = vmatpush.msra.mxu0 %v1705
    %2197 = vmatpush.msra.mxu0 %v1699
    %2198 = vmatmul.f32.gmra.mxu0 %v1502
    %v2199 = vpop.f32.mrf.mxu0
    %v2200 = vadd.f32 %v2180, %v2199
    %2201 = vdwg.mxu0
    %2202 = vmatpush.msra.mxu0 %v1885
    %2203 = vmatpush.msra.mxu0 %v1879
    %2204 = vmatpush.msra.mxu0 %v1873
    %2205 = vmatpush.msra.mxu0 %v1867
    %2206 = vmatpush.msra.mxu0 %v1861
    %2207 = vmatpush.msra.mxu0 %v1855
    %2208 = vmatpush.msra.mxu0 %v1849
    %2209 = vmatpush.msra.mxu0 %v1843
    %2210 = vmatpush.msra.mxu0 %v1837
    %2211 = vmatpush.msra.mxu0 %v1831
    %2212 = vmatpush.msra.mxu0 %v1825
    %2213 = vmatpush.msra.mxu0 %v1819
    %2214 = vmatpush.msra.mxu0 %v1813
    %2215 = vmatpush.msra.mxu0 %v1807
    %2216 = vmatpush.msra.mxu0 %v1801
    %2217 = vmatpush.msra.mxu0 %v1795
    %2218 = vmatmul.f32.gmra.mxu0 %v1503
    %v2219 = vpop.f32.mrf.mxu0
    %v2220 = vadd.f32 %v2200, %v2219
    %2221 = vdwg.mxu0
    %2222 = vmatpush.msra.mxu0 %v1598
    %2223 = vmatpush.msra.mxu0 %v1592
    %2224 = vmatpush.msra.mxu0 %v1586
    %2225 = vmatpush.msra.mxu0 %v1580
    %2226 = vmatpush.msra.mxu0 %v1574
    %2227 = vmatpush.msra.mxu0 %v1568
    %2228 = vmatpush.msra.mxu0 %v1562
    %2229 = vmatpush.msra.mxu0 %v1556
    %2230 = vmatpush.msra.mxu0 %v1550
    %2231 = vmatpush.msra.mxu0 %v1544
    %2232 = vmatpush.msra.mxu0 %v1538
    %2233 = vmatpush.msra.mxu0 %v1532
    %2234 = vmatpush.msra.mxu0 %v1526
    %2235 = vmatpush.msra.mxu0 %v1520
    %2236 = vmatpush.msra.mxu0 %v1514
    %2237 = vmatpush.msra.mxu0 %v1508
    %2238 = vmatmul.f32.gmra.mxu0 %v1500
    %v2239 = vpop.f32.mrf.mxu0
    %v2240 = vadd.f32 %v1894, %v2239
    %2241 = vdwg.mxu0
    %2242 = vmatpush.msra.mxu0 %v1694
    %2243 = vmatpush.msra.mxu0 %v1688
    %2244 = vmatpush.msra.mxu0 %v1682
    %2245 = vmatpush.msra.mxu0 %v1676
    %2246 = vmatpush.msra.mxu0 %v1670
    %2247 = vmatpush.msra.mxu0 %v1664
    %2248 = vmatpush.msra.mxu0 %v1658
    %2249 = vmatpush.msra.mxu0 %v1652
    %2250 = vmatpush.msra.mxu0 %v1646
    %2251 = vmatpush.msra.mxu0 %v1640
    %2252 = vmatpush.msra.mxu0 %v1634
    %2253 = vmatpush.msra.mxu0 %v1628
    %2254 = vmatpush.msra.mxu0 %v1622
    %2255 = vmatpush.msra.mxu0 %v1616
    %2256 = vmatpush.msra.mxu0 %v1610
    %2257 = vmatpush.msra.mxu0 %v1604
    %2258 = vmatmul.f32.gmra.mxu0 %v1501
    %v2259 = vpop.f32.mrf.mxu0
    %v2260 = vadd.f32 %v2240, %v2259
    %2261 = vdwg.mxu0
    %2262 = vmatpush.msra.mxu0 %v1790
    %2263 = vmatpush.msra.mxu0 %v1784
    %2264 = vmatpush.msra.mxu0 %v1778
    %2265 = vmatpush.msra.mxu0 %v1772
    %2266 = vmatpush.msra.mxu0 %v1766
    %2267 = vmatpush.msra.mxu0 %v1760
    %2268 = vmatpush.msra.mxu0 %v1754
    %2269 = vmatpush.msra.mxu0 %v1748
    %2270 = vmatpush.msra.mxu0 %v1742
    %2271 = vmatpush.msra.mxu0 %v1736
    %2272 = vmatpush.msra.mxu0 %v1730
    %2273 = vmatpush.msra.mxu0 %v1724
    %2274 = vmatpush.msra.mxu0 %v1718
    %2275 = vmatpush.msra.mxu0 %v1712
    %2276 = vmatpush.msra.mxu0 %v1706
    %2277 = vmatpush.msra.mxu0 %v1700
    %2278 = vmatmul.f32.gmra.mxu0 %v1502
    %v2279 = vpop.f32.mrf.mxu0
    %v2280 = vadd.f32 %v2260, %v2279
    %2281 = vdwg.mxu0
    %2282 = vmatpush.msra.mxu0 %v1886
    %2283 = vmatpush.msra.mxu0 %v1880
    %2284 = vmatpush.msra.mxu0 %v1874
    %2285 = vmatpush.msra.mxu0 %v1868
    %2286 = vmatpush.msra.mxu0 %v1862
    %2287 = vmatpush.msra.mxu0 %v1856
    %2288 = vmatpush.msra.mxu0 %v1850
    %2289 = vmatpush.msra.mxu0 %v1844
    %2290 = vmatpush.msra.mxu0 %v1838
    %2291 = vmatpush.msra.mxu0 %v1832
    %2292 = vmatpush.msra.mxu0 %v1826
    %2293 = vmatpush.msra.mxu0 %v1820
    %2294 = vmatpush.msra.mxu0 %v1814
    %2295 = vmatpush.msra.mxu0 %v1808
    %2296 = vmatpush.msra.mxu0 %v1802
    %2297 = vmatpush.msra.mxu0 %v1796
    %2298 = vmatmul.f32.gmra.mxu0 %v1503
    %v2299 = vpop.f32.mrf.mxu0
    %v2300 = vadd.f32 %v2280, %v2299
    %2301 = vdwg.mxu0
    %2302 = vmatpush.msra.mxu0 %v1599
    %2303 = vmatpush.msra.mxu0 %v1593
    %2304 = vmatpush.msra.mxu0 %v1587
    %2305 = vmatpush.msra.mxu0 %v1581
    %2306 = vmatpush.msra.mxu0 %v1575
    %2307 = vmatpush.msra.mxu0 %v1569
    %2308 = vmatpush.msra.mxu0 %v1563
    %2309 = vmatpush.msra.mxu0 %v1557
    %2310 = vmatpush.msra.mxu0 %v1551
    %2311 = vmatpush.msra.mxu0 %v1545
    %2312 = vmatpush.msra.mxu0 %v1539
    %2313 = vmatpush.msra.mxu0 %v1533
    %2314 = vmatpush.msra.mxu0 %v1527
    %2315 = vmatpush.msra.mxu0 %v1521
    %2316 = vmatpush.msra.mxu0 %v1515
    %2317 = vmatpush.msra.mxu0 %v1509
    %2318 = vmatmul.f32.gmra.mxu0 %v1500
    %v2319 = vpop.f32.mrf.mxu0
    %v2320 = vadd.f32 %v1895, %v2319
    %2321 = vdwg.mxu0
    %2322 = vmatpush.msra.mxu0 %v1695
    %2323 = vmatpush.msra.mxu0 %v1689
    %2324 = vmatpush.msra.mxu0 %v1683
    %2325 = vmatpush.msra.mxu0 %v1677
    %2326 = vmatpush.msra.mxu0 %v1671
    %2327 = vmatpush.msra.mxu0 %v1665
    %2328 = vmatpush.msra.mxu0 %v1659
    %2329 = vmatpush.msra.mxu0 %v1653
    %2330 = vmatpush.msra.mxu0 %v1647
    %2331 = vmatpush.msra.mxu0 %v1641
    %2332 = vmatpush.msra.mxu0 %v1635
    %2333 = vmatpush.msra.mxu0 %v1629
    %2334 = vmatpush.msra.mxu0 %v1623
    %2335 = vmatpush.msra.mxu0 %v1617
    %2336 = vmatpush.msra.mxu0 %v1611
    %2337 = vmatpush.msra.mxu0 %v1605
    %2338 = vmatmul.f32.gmra.mxu0 %v1501
    %v2339 = vpop.f32.mrf.mxu0
    %v2340 = vadd.f32 %v2320, %v2339
    %2341 = vdwg.mxu0
    %2342 = vmatpush.msra.mxu0 %v1791
    %2343 = vmatpush.msra.mxu0 %v1785
    %2344 = vmatpush.msra.mxu0 %v1779
    %2345 = vmatpush.msra.mxu0 %v1773
    %2346 = vmatpush.msra.mxu0 %v1767
    %2347 = vmatpush.msra.mxu0 %v1761
    %2348 = vmatpush.msra.mxu0 %v1755
    %2349 = vmatpush.msra.mxu0 %v1749
    %2350 = vmatpush.msra.mxu0 %v1743
    %2351 = vmatpush.msra.mxu0 %v1737
    %2352 = vmatpush.msra.mxu0 %v1731
    %2353 = vmatpush.msra.mxu0 %v1725
    %2354 = vmatpush.msra.mxu0 %v1719
    %2355 = vmatpush.msra.mxu0 %v1713
    %2356 = vmatpush.msra.mxu0 %v1707
    %2357 = vmatpush.msra.mxu0 %v1701
    %2358 = vmatmul.f32.gmra.mxu0 %v1502
    %v2359 = vpop.f32.mrf.mxu0
    %v2360 = vadd.f32 %v2340, %v2359
    %2361 = vdwg.mxu0
    %2362 = vmatpush.msra.mxu0 %v1887
    %2363 = vmatpush.msra.mxu0 %v1881
    %2364 = vmatpush.msra.mxu0 %v1875
    %2365 = vmatpush.msra.mxu0 %v1869
    %2366 = vmatpush.msra.mxu0 %v1863
    %2367 = vmatpush.msra.mxu0 %v1857
    %2368 = vmatpush.msra.mxu0 %v1851
    %2369 = vmatpush.msra.mxu0 %v1845
    %2370 = vmatpush.msra.mxu0 %v1839
    %2371 = vmatpush.msra.mxu0 %v1833
    %2372 = vmatpush.msra.mxu0 %v1827
    %2373 = vmatpush.msra.mxu0 %v1821
    %2374 = vmatpush.msra.mxu0 %v1815
    %2375 = vmatpush.msra.mxu0 %v1809
    %2376 = vmatpush.msra.mxu0 %v1803
    %2377 = vmatpush.msra.mxu0 %v1797
    %2378 = vmatmul.f32.gmra.mxu0 %v1503
    %v2379 = vpop.f32.mrf.mxu0
    %v2380 = vadd.f32 %v2360, %v2379
    %2381 = vdwg.mxu0
    %v2382 = vsub.f32 0.0, %v1980
    %v2383 = vsub.f32 0.0, %v2060
    %v2384 = vsub.f32 0.0, %v2140
    %v2385 = vsub.f32 0.0, %v2220
    %v2386 = vsub.f32 0.0, %v2300
    %v2387 = vsub.f32 0.0, %v2380
    %v2388 = vmul.f32 %v2382, 1.442695
    %v2389 = vpow.pop %v2388
    %v2390 = vmul.f32 %v2383, 1.442695
    %v2391 = vpow.pop %v2390
    %v2392 = vmul.f32 %v2384, 1.442695
    %v2393 = vpow.pop %v2392
    %v2394 = vmul.f32 %v2385, 1.442695
    %v2395 = vpow.pop %v2394
    %v2396 = vmul.f32 %v2386, 1.442695
    %v2397 = vpow.pop %v2396
    %v2398 = vmul.f32 %v2387, 1.442695
    %v2399 = vpow.pop %v2398
    %v2400 = vadd.f32 %v2389, 1.0
    %v2401 = vadd.f32 %v2391, 1.0
    %v2402 = vadd.f32 %v2393, 1.0
    %v2403 = vadd.f32 %v2395, 1.0
    %v2404 = vadd.f32 %v2397, 1.0
    %v2405 = vadd.f32 %v2399, 1.0
    %v2406 = vrcp.pop %v2400
    %v2407 = vrcp.pop %v2401
    %v2408 = vrcp.pop %v2402
    %v2409 = vrcp.pop %v2403
    %v2410 = vrcp.pop %v2404
    %v2411 = vrcp.pop %v2405
    %v2418 = vrot.slane %v2407, 6
    %v2419 = vrot.slane %v2408, 4
    %v2420 = vrot.slane %v2409, 2
    %v2421 = vrot.slane %v2411, 6
    %vm2422 = vcmask 1041408
    %v2423 = vsel %vm2422, %v2406, %v2418
    %vm2424 = vcmask 1045508
    %v2425 = vsel %vm2424, %v2419, %v2420
    %vm2426 = vcmask 1043456
    %v2427 = vsel %vm2426, %v2423, %v2425
    %v2428 = vsel %vm2422, %v2410, %v2421
    %2431 = vst [vmem:[%s13] sm:$0xff] %v2427
    %2432 = vst [vmem:[%s13 + $0x8] sm:$0xf] %v2428
    // Predicated region
    $region102: #{cae1_forward.1} parent=1 // pred_check
      _
    $region103: #{cae1_forward.1} parent=1 // pred_check_branch
      %2434 = sbr.rel (0) target = $region105
    $region104: #{cae1_forward.1} parent=1 // pred_region
      _
    $region105: #{cae1_forward.1} parent=1 // pred_fallthru
      _
    // Predicated region
    $region106: #{cae1_forward.1} parent=1 // pred_check
      _
    $region107: #{cae1_forward.1} parent=1 // pred_check_branch
      %2436 = sbr.rel (0) target = $region109
    $region108: #{cae1_forward.1} parent=1 // pred_region
      _
    $region109: #{cae1_forward.1} parent=1 // pred_fallthru
      _
    %2437 = vsyncpa [#allocation3], 1
    %2438 = vsyncpa [#allocation5], 1
    %2439 = vsyncpa [#allocation8], 1
    %2440 = vsyncpa [#allocation11], 1
    %2441 = vsyncpa [#allocation14], 1
    %2442 = vsyncpa [#allocation17], 1
    %2443 = vsyncpa [#allocation20], 1

</llo_original>
